<compile_context>
chip_gen: v7x
topology: tpu7x:2x2x1
jax: 0.10.0
libtpu: 0.0.40
codegen_flags: <defaults>
</compile_context>

<pallas_src>
import functools

import jax
import jax.numpy as jnp
from jax import lax
from jax.experimental import pallas as pl
from jax.experimental.pallas import tpu as pltpu

G = 4                 # |C4|
C_REG = 4 * G         # 4 regular fields -> 16 channels
K_TAPS = 9            # 3x3 kernel taps


def _round_up(x, m):
    return (x + m - 1) // m * m


def _pack_w(w, dtype):
    """(3,3,Cin,Cout) HWIO -> (Cout, 9*Cin) with k = (dy*3+dx)*Cin + ci."""
    kh, kw, cin, cout = w.shape
    return jnp.transpose(w, (3, 0, 1, 2)).reshape(cout, kh * kw * cin).astype(dtype)


def _choose_b_tile(n):
    """Images per grid step: >=2 grid steps (v7x 2-TC), power of 2, capped."""
    if n <= 2:
        return 1
    bt = 1
    while bt * 2 <= min(32, n // 2):
        bt *= 2
    return bt


# ---------------------------------------------------------------------------
# Fused kernel: layer1(+ReLU) -> layer2(+ReLU) -> final_layer, B_TILE images
# per grid step.  Activations live in the "flattened padded plane" layout:
# image b occupies lanes [b*LE, (b+1)*LE) of the (C, B_TILE*LE) scratch, with
# its (H+2)*(W+2) plane at offset PAD_SHIFT (zero halo on both sides), so a
# conv tap (dy,dx) is a static lane-offset window of width LD.
# ---------------------------------------------------------------------------
def fused_c4_kernel(x_ref, mask_ref, w1_ref, b1_ref, w2_ref, b2_ref,
                    w3_ref, b3_ref, o_ref, aext_ref, patch_ref,
                    *, wp, pad_shift, ld, le, b_tile, img_chunk):
    C = C_REG
    # lane shift of tap (dy, dx) inside the flattened padded plane
    shifts = [(dy - 1) * wp + (dx - 1) for dy in range(3) for dx in range(3)]

    mask_c = jnp.broadcast_to(mask_ref[...], (C, ld))   # hoisted interior mask
    w1 = w1_ref[...]                                    # (16, 9)  f32
    b1 = b1_ref[...]                                    # (16, 1)  f32
    b2 = b2_ref[...]                                    # (16, 1)  f32
    b3 = b3_ref[...]                                    # (1, 1)   f32

    # Zero only the halo lanes of the activation scratch (interior is fully
    # overwritten each step; halo is never dirtied).  Safe under "parallel"
    # grid sharding since it runs every step and is cheap (2 vregs / image).
    halo_l = jnp.zeros((C, pad_shift), jnp.bfloat16)
    halo_r = jnp.zeros((C, le - pad_shift - ld), jnp.bfloat16)
    for b in range(b_tile):
        aext_ref[:, b * le:b * le + pad_shift] = halo_l
        aext_ref[:, b * le + pad_shift + ld:(b + 1) * le] = halo_r

    # ---- layer 1: trivial (1 ch) -> 16 ch.  Cin == 1, so 9 f32 VPU
    #      broadcast-MACs per image beat a degenerate K=9 MXU matmul.
    for b in range(b_tile):
        base = b * le + pad_shift
        hb = jnp.zeros((C, ld), jnp.float32)
        for k, s in enumerate(shifts):
            tap = x_ref[0, :, base + s:base + s + ld]        # (1, LD) f32
            hb = hb + w1[:, k:k + 1] * tap
        hb = jnp.maximum(hb + b1, 0.0) * mask_c
        aext_ref[:, base:base + ld] = hb.astype(jnp.bfloat16)

    # ---- layer 2: bf16 im2col into (144, B_TILE*LD) scratch, then one
    #      (16,144)@(144, chunk*LD) MXU matmul per image chunk (f32 acc),
    #      bias + ReLU + mask in f32, write back bf16.
    for b in range(b_tile):
        base = b * le + pad_shift
        for k, s in enumerate(shifts):
            patch_ref[k * C:(k + 1) * C, b * ld:(b + 1) * ld] = \
                aext_ref[:, base + s:base + s + ld]
    w2 = w2_ref[...]                                         # (16, 144) bf16
    for c0 in range(0, b_tile, img_chunk):
        nimg = min(img_chunk, b_tile - c0)
        h2 = jnp.dot(w2, patch_ref[:, c0 * ld:(c0 + nimg) * ld],
                     preferred_element_type=jnp.float32) + b2
        h2 = jnp.maximum(h2, 0.0)
        for j in range(nimg):
            b = c0 + j
            base = b * le + pad_shift
            aext_ref[:, base:base + ld] = \
                (h2[:, j * ld:(j + 1) * ld] * mask_c).astype(jnp.bfloat16)

    # ---- final layer (16 -> 1, bias, no ReLU): NO second im2col.  Per image
    #      compute T = w3_taps(9,16) @ aext(16, LE) once, then accumulate the
    #      9 statically shifted lane windows of T (VPU adds on idle slots).
    w3 = w3_ref[...]                                         # (9, 16) bf16
    parts = []
    for b in range(b_tile):
        seg = aext_ref[:, b * le:(b + 1) * le]               # (16, LE) bf16
        t = jnp.dot(w3, seg, preferred_element_type=jnp.float32)   # (9, LE)
        acc = jnp.zeros((1, ld), jnp.float32)
        for k, s in enumerate(shifts):
            acc = acc + t[k:k + 1, pad_shift + s:pad_shift + s + ld]
        parts.append(acc + b3)
    y = parts[0] if b_tile == 1 else jnp.concatenate(parts, axis=1)
    o_ref[0] = y.astype(o_ref.dtype)                         # (1, B_TILE*LD)


# ---------------------------------------------------------------------------
# Forward pass (matches EquivariantForecastingNet.forward), NCHW in/out.
# ---------------------------------------------------------------------------
def forward(x_nchw, params, b_tile=None):
    (w1, b1), (w2, b2), (w3, b3) = params
    N, Cin, H, W = x_nchw.shape
    assert Cin == 1, "in_type is a single trivial field"
    Hp, Wp = H + 2, W + 2
    L = Hp * Wp                                   # 324 flattened padded plane
    LD = _round_up(L, 128)                        # 384 lane-dense compute domain
    PAD_SHIFT = _round_up(Wp + 1, 128)            # 128, lane-tile aligned halo
    LE = _round_up(PAD_SHIFT + LD + Wp + 1, 128)  # 640 extended per-image storage

    if b_tile is None:
        b_tile = _choose_b_tile(N)
    img_chunk = min(b_tile, 4)                    # bounds live vregs of the dot
    n_pad = _round_up(N, b_tile)
    nb = n_pad // b_tile

    # Flatten-with-halo input: (nb, 1, B_TILE*LE) f32, image b's padded plane
    # at lanes [b*LE + PAD_SHIFT, b*LE + PAD_SHIFT + L).
    xp = jnp.pad(x_nchw[:, 0].astype(jnp.float32),
                 ((0, n_pad - N), (1, 1), (1, 1)))
    x_ext = jnp.zeros((n_pad, LE), jnp.float32)
    x_ext = x_ext.at[:, PAD_SHIFT:PAD_SHIFT + L].set(xp.reshape(n_pad, L))
    x_ext = x_ext.reshape(nb, b_tile * LE)[:, None, :]

    # Interior mask over the per-image compute domain
    m = jnp.pad(jnp.ones((H, W), jnp.float32), ((1, 1), (1, 1))).reshape(L)
    mask = jnp.zeros((1, LD), jnp.float32).at[0, :L].set(m)

    # Weights: layer-1 stays f32 (VPU path); MXU operands in bf16.
    w1m = _pack_w(w1, jnp.float32)                               # (16, 9)
    w2m = _pack_w(w2, jnp.bfloat16)                              # (16, 144)
    w3t = w3[:, :, :, 0].reshape(K_TAPS, C_REG).astype(jnp.bfloat16)  # (9, 16)
    b1v = b1.reshape(C_REG, 1).astype(jnp.float32)
    b2v = b2.reshape(C_REG, 1).astype(jnp.float32)
    b3v = b3.reshape(1, 1).astype(jnp.float32)

    kern = functools.partial(fused_c4_kernel, wp=Wp, pad_shift=PAD_SHIFT,
                             ld=LD, le=LE, b_tile=b_tile, img_chunk=img_chunk)
    out_flat = pl.pallas_call(
        kern,
        out_shape=jax.ShapeDtypeStruct((nb, 1, b_tile * LD), jnp.float32),
        grid_spec=pltpu.PrefetchScalarGridSpec(
            num_scalar_prefetch=0,
            grid=(nb,),
            in_specs=[
                pl.BlockSpec((1, 1, b_tile * LE), lambda n: (n, 0, 0)),   # x_ext
                pl.BlockSpec((1, LD), lambda n: (0, 0)),                  # mask
                pl.BlockSpec((C_REG, K_TAPS), lambda n: (0, 0)),          # w1
                pl.BlockSpec((C_REG, 1), lambda n: (0, 0)),               # b1
                pl.BlockSpec((C_REG, K_TAPS * C_REG), lambda n: (0, 0)),  # w2
                pl.BlockSpec((C_REG, 1), lambda n: (0, 0)),               # b2
                pl.BlockSpec((K_TAPS, C_REG), lambda n: (0, 0)),          # w3 taps
                pl.BlockSpec((1, 1), lambda n: (0, 0)),                   # b3
            ],
            out_specs=pl.BlockSpec((1, 1, b_tile * LD), lambda n: (n, 0, 0)),
            scratch_shapes=[
                pltpu.VMEM((C_REG, b_tile * LE), jnp.bfloat16),           # act.
                pltpu.VMEM((K_TAPS * C_REG, b_tile * LD), jnp.bfloat16),  # im2col
            ],
        ),
        compiler_params=pltpu.CompilerParams(
            dimension_semantics=("parallel",)),
    )(x_ext, mask, w1m, b1v, w2m, b2v, w3t, b3v)

    y = out_flat.reshape(n_pad, LD)[:N, :L].reshape(N, Hp, Wp)[:, 1:H + 1, 1:W + 1]
    return y[:, None, :, :]                                   # NCHW (N,1,H,W)


# ---------------------------------------------------------------------------
# Deterministic, C4-equivariant parameter construction (HWIO weight layout).
# Regular-repr biases are tied across the 4 group channels of each field.
# ---------------------------------------------------------------------------
def _rot(f, k):
    return jnp.rot90(f, k=k, axes=(0, 1))


def init_params(key):
    ks = jax.random.split(key, 6)

    # layer1: trivial -> 4 regular fields (16 out channels)
    base1 = jax.random.normal(ks[0], (4, 3, 3), jnp.float32) * 0.3
    w1 = jnp.zeros((3, 3, 1, 4 * G), jnp.float32)
    for f in range(4):
        for g in range(G):
            w1 = w1.at[:, :, 0, f * G + g].set(_rot(base1[f], g))
    b1 = jnp.repeat(jax.random.normal(ks[1], (4,), jnp.float32) * 0.1, G)

    # layer2: 4 regular -> 4 regular (16 -> 16 channels)
    base2 = jax.random.normal(ks[2], (4, 4, G, 3, 3), jnp.float32) * (0.3 / 4.0)
    w2 = jnp.zeros((3, 3, 4 * G, 4 * G), jnp.float32)
    for fo in range(4):
        for fi in range(4):
            for g in range(G):
                for h in range(G):
                    w2 = w2.at[:, :, fi * G + h, fo * G + g].set(
                        _rot(base2[fo, fi, (h - g) % G], g))
    b2 = jnp.repeat(jax.random.normal(ks[3], (4,), jnp.float32) * 0.1, G)

    # final: 4 regular -> trivial (16 -> 1 channel)
    base3 = jax.random.normal(ks[4], (4, 3, 3), jnp.float32) * (0.3 / 4.0)
    w3 = jnp.zeros((3, 3, 4 * G, 1), jnp.float32)
    for fi in range(4):
        for h in range(G):
            w3 = w3.at[:, :, fi * G + h, 0].set(_rot(base3[fi], h))
    b3 = jax.random.normal(ks[5], (1,), jnp.float32) * 0.1

    return (w1, b1), (w2, b2), (w3, b3)


# Pure-JAX reference (lax.conv, f32) for a correctness check of the Pallas path.
def forward_ref(x_nchw, params):
    (w1, b1), (w2, b2), (w3, b3) = params
    dn = lax.conv_dimension_numbers(x_nchw.shape, (3, 3, 1, 16),
                                    ("NCHW", "HWIO", "NCHW"))

    def conv(x, w, b):
        y = lax.conv_general_dilated(x, w, (1, 1), "SAME",
                                     dimension_numbers=dn)
        return y + b.reshape(1, -1, 1, 1)

    h = jnp.maximum(conv(x_nchw, w1, b1), 0.0)
    h = jnp.maximum(conv(h, w2, b2), 0.0)
    return conv(h, w3, b3)


if __name__ == "__main__":
    key = jax.random.PRNGKey(0)
    k_x, k_p = jax.random.split(key)

    # Input matches the module's in_type: 1 trivial field -> NCHW (2, 1, 16, 16)
    x = jax.random.normal(k_x, (2, 1, 16, 16), jnp.float32)
    params = init_params(k_p)

    fwd = jax.jit(forward)
    out = jax.block_until_ready(fwd(x, params))
    assert out.shape == (2, 1, 16, 16)

    ref = jax.block_until_ready(forward_ref(x, params))
    err = float(jnp.max(jnp.abs(out - ref)))
    # bf16 MXU operands (f32 accumulation) => looser tolerance than pure f32.
    assert err < 5e-2, f"max abs err {err}"

    print("KERNEL_OK")
</pallas_src>

<mosaic_0001>
module attributes {stable_mosaic.version = 11 : i64} {
  func.func @fused_c4_kernel(%arg0: i32, %arg1: memref<1x1x640xf32, #tpu.memory_space<vmem>>, %arg2: memref<1x384xf32, #tpu.memory_space<vmem>>, %arg3: memref<16x9xf32, #tpu.memory_space<vmem>>, %arg4: memref<16x1xf32, #tpu.memory_space<vmem>>, %arg5: memref<16x144xbf16, #tpu.memory_space<vmem>>, %arg6: memref<16x1xf32, #tpu.memory_space<vmem>>, %arg7: memref<9x16xbf16, #tpu.memory_space<vmem>>, %arg8: memref<1x1xf32, #tpu.memory_space<vmem>>, %arg9: memref<1x1x384xf32, #tpu.memory_space<vmem>>, %arg10: memref<16x640xbf16, #tpu.memory_space<vmem>>, %arg11: memref<144x384xbf16, #tpu.memory_space<vmem>>) attributes {dimension_semantics = [#tpu.dimension_semantics<parallel>], iteration_bounds = array<i64: 2>, scalar_prefetch = 0 : i64, scratch_operands = 2 : i64, tpu.core_type = #tpu.core_type<tc>, window_params = [{transform_indices = @transform_0, window_bounds = array<i64: 1, 1, 640>}, {pipeline_mode = #tpu.pipeline_mode<synchronous>, transform_indices = @transform_1, window_bounds = array<i64: 1, 384>}, {pipeline_mode = #tpu.pipeline_mode<synchronous>, transform_indices = @transform_2, window_bounds = array<i64: 16, 9>}, {pipeline_mode = #tpu.pipeline_mode<synchronous>, transform_indices = @transform_3, window_bounds = array<i64: 16, 1>}, {pipeline_mode = #tpu.pipeline_mode<synchronous>, transform_indices = @transform_4, window_bounds = array<i64: 16, 144>}, {pipeline_mode = #tpu.pipeline_mode<synchronous>, transform_indices = @transform_5, window_bounds = array<i64: 16, 1>}, {pipeline_mode = #tpu.pipeline_mode<synchronous>, transform_indices = @transform_6, window_bounds = array<i64: 9, 16>}, {pipeline_mode = #tpu.pipeline_mode<synchronous>, transform_indices = @transform_7, window_bounds = array<i64: 1, 1>}, {transform_indices = @transform_8, window_bounds = array<i64: 1, 1, 384>}]} {
    %c0 = arith.constant 0 : index
    %c0_0 = arith.constant 0 : index
    %0 = vector.load %arg2[%c0, %c0_0] : memref<1x384xf32, #tpu.memory_space<vmem>>, vector<1x384xf32>
    %1 = vector.shape_cast %0 : vector<1x384xf32> to vector<1x384xf32>
    %2 = vector.broadcast %1 : vector<1x384xf32> to vector<16x384xf32>
    %c0_1 = arith.constant 0 : index
    %c0_2 = arith.constant 0 : index
    %3 = vector.load %arg3[%c0_1, %c0_2] : memref<16x9xf32, #tpu.memory_space<vmem>>, vector<16x9xf32>
    %c0_3 = arith.constant 0 : index
    %c0_4 = arith.constant 0 : index
    %4 = vector.load %arg4[%c0_3, %c0_4] : memref<16x1xf32, #tpu.memory_space<vmem>>, vector<16x1xf32>
    %c0_5 = arith.constant 0 : index
    %c0_6 = arith.constant 0 : index
    %5 = vector.load %arg6[%c0_5, %c0_6] : memref<16x1xf32, #tpu.memory_space<vmem>>, vector<16x1xf32>
    %c0_7 = arith.constant 0 : index
    %c0_8 = arith.constant 0 : index
    %6 = vector.load %arg8[%c0_7, %c0_8] : memref<1x1xf32, #tpu.memory_space<vmem>>, vector<1x1xf32>
    %cst = arith.constant 0.000000e+00 : bf16
    %7 = vector.broadcast %cst : bf16 to vector<16x128xbf16>
    %cst_9 = arith.constant 0.000000e+00 : bf16
    %8 = vector.broadcast %cst_9 : bf16 to vector<16x128xbf16>
    %c0_10 = arith.constant 0 : index
    %c0_11 = arith.constant 0 : index
    %9 = vector.load %arg10[%c0_10, %c0_11] : memref<16x640xbf16, #tpu.memory_space<vmem>>, vector<16x128xbf16>
    tpu.vector_store %arg10[%c0_10, %c0_11], %7 {strides = array<i32>} : memref<16x640xbf16, #tpu.memory_space<vmem>>, vector<16x128xbf16>,
    %c0_12 = arith.constant 0 : index
    %c512 = arith.constant 512 : index
    %10 = vector.load %arg10[%c0_12, %c512] : memref<16x640xbf16, #tpu.memory_space<vmem>>, vector<16x128xbf16>
    tpu.vector_store %arg10[%c0_12, %c512], %8 {strides = array<i32>} : memref<16x640xbf16, #tpu.memory_space<vmem>>, vector<16x128xbf16>,
    %cst_13 = arith.constant 0.000000e+00 : f32
    %11 = vector.broadcast %cst_13 : f32 to vector<16x384xf32>
    %c0_14 = arith.constant 0 : index
    %c0_15 = arith.constant 0 : index
    %c109 = arith.constant 109 : index
    %12 = vector.load %arg1[%c0_14, %c0_15, %c109] : memref<1x1x640xf32, #tpu.memory_space<vmem>>, vector<1x1x384xf32>
    %13 = vector.shape_cast %12 : vector<1x1x384xf32> to vector<1x384xf32>
    %14 = vector.extract_strided_slice %3 {offsets = [0, 0], sizes = [16, 1], strides = [1, 1]} : vector<16x9xf32> to vector<16x1xf32>
    %15 = vector.broadcast %14 : vector<16x1xf32> to vector<16x384xf32>
    %16 = vector.broadcast %13 : vector<1x384xf32> to vector<16x384xf32>
    %17 = arith.mulf %15, %16 : vector<16x384xf32>
    %18 = arith.addf %11, %17 : vector<16x384xf32>
    %c0_16 = arith.constant 0 : index
    %c0_17 = arith.constant 0 : index
    %c110 = arith.constant 110 : index
    %19 = vector.load %arg1[%c0_16, %c0_17, %c110] : memref<1x1x640xf32, #tpu.memory_space<vmem>>, vector<1x1x384xf32>
    %20 = vector.shape_cast %19 : vector<1x1x384xf32> to vector<1x384xf32>
    %21 = vector.extract_strided_slice %3 {offsets = [0, 1], sizes = [16, 1], strides = [1, 1]} : vector<16x9xf32> to vector<16x1xf32>
    %22 = vector.broadcast %21 : vector<16x1xf32> to vector<16x384xf32>
    %23 = vector.broadcast %20 : vector<1x384xf32> to vector<16x384xf32>
    %24 = arith.mulf %22, %23 : vector<16x384xf32>
    %25 = arith.addf %18, %24 : vector<16x384xf32>
    %c0_18 = arith.constant 0 : index
    %c0_19 = arith.constant 0 : index
    %c111 = arith.constant 111 : index
    %26 = vector.load %arg1[%c0_18, %c0_19, %c111] : memref<1x1x640xf32, #tpu.memory_space<vmem>>, vector<1x1x384xf32>
    %27 = vector.shape_cast %26 : vector<1x1x384xf32> to vector<1x384xf32>
    %28 = vector.extract_strided_slice %3 {offsets = [0, 2], sizes = [16, 1], strides = [1, 1]} : vector<16x9xf32> to vector<16x1xf32>
    %29 = vector.broadcast %28 : vector<16x1xf32> to vector<16x384xf32>
    %30 = vector.broadcast %27 : vector<1x384xf32> to vector<16x384xf32>
    %31 = arith.mulf %29, %30 : vector<16x384xf32>
    %32 = arith.addf %25, %31 : vector<16x384xf32>
    %c0_20 = arith.constant 0 : index
    %c0_21 = arith.constant 0 : index
    %c127 = arith.constant 127 : index
    %33 = vector.load %arg1[%c0_20, %c0_21, %c127] : memref<1x1x640xf32, #tpu.memory_space<vmem>>, vector<1x1x384xf32>
    %34 = vector.shape_cast %33 : vector<1x1x384xf32> to vector<1x384xf32>
    %35 = vector.extract_strided_slice %3 {offsets = [0, 3], sizes = [16, 1], strides = [1, 1]} : vector<16x9xf32> to vector<16x1xf32>
    %36 = vector.broadcast %35 : vector<16x1xf32> to vector<16x384xf32>
    %37 = vector.broadcast %34 : vector<1x384xf32> to vector<16x384xf32>
    %38 = arith.mulf %36, %37 : vector<16x384xf32>
    %39 = arith.addf %32, %38 : vector<16x384xf32>
    %c0_22 = arith.constant 0 : index
    %c0_23 = arith.constant 0 : index
    %c128 = arith.constant 128 : index
    %40 = vector.load %arg1[%c0_22, %c0_23, %c128] : memref<1x1x640xf32, #tpu.memory_space<vmem>>, vector<1x1x384xf32>
    %41 = vector.shape_cast %40 : vector<1x1x384xf32> to vector<1x384xf32>
    %42 = vector.extract_strided_slice %3 {offsets = [0, 4], sizes = [16, 1], strides = [1, 1]} : vector<16x9xf32> to vector<16x1xf32>
    %43 = vector.broadcast %42 : vector<16x1xf32> to vector<16x384xf32>
    %44 = vector.broadcast %41 : vector<1x384xf32> to vector<16x384xf32>
    %45 = arith.mulf %43, %44 : vector<16x384xf32>
    %46 = arith.addf %39, %45 : vector<16x384xf32>
    %c0_24 = arith.constant 0 : index
    %c0_25 = arith.constant 0 : index
    %c129 = arith.constant 129 : index
    %47 = vector.load %arg1[%c0_24, %c0_25, %c129] : memref<1x1x640xf32, #tpu.memory_space<vmem>>, vector<1x1x384xf32>
    %48 = vector.shape_cast %47 : vector<1x1x384xf32> to vector<1x384xf32>
    %49 = vector.extract_strided_slice %3 {offsets = [0, 5], sizes = [16, 1], strides = [1, 1]} : vector<16x9xf32> to vector<16x1xf32>
    %50 = vector.broadcast %49 : vector<16x1xf32> to vector<16x384xf32>
    %51 = vector.broadcast %48 : vector<1x384xf32> to vector<16x384xf32>
    %52 = arith.mulf %50, %51 : vector<16x384xf32>
    %53 = arith.addf %46, %52 : vector<16x384xf32>
    %c0_26 = arith.constant 0 : index
    %c0_27 = arith.constant 0 : index
    %c145 = arith.constant 145 : index
    %54 = vector.load %arg1[%c0_26, %c0_27, %c145] : memref<1x1x640xf32, #tpu.memory_space<vmem>>, vector<1x1x384xf32>
    %55 = vector.shape_cast %54 : vector<1x1x384xf32> to vector<1x384xf32>
    %56 = vector.extract_strided_slice %3 {offsets = [0, 6], sizes = [16, 1], strides = [1, 1]} : vector<16x9xf32> to vector<16x1xf32>
    %57 = vector.broadcast %56 : vector<16x1xf32> to vector<16x384xf32>
    %58 = vector.broadcast %55 : vector<1x384xf32> to vector<16x384xf32>
    %59 = arith.mulf %57, %58 : vector<16x384xf32>
    %60 = arith.addf %53, %59 : vector<16x384xf32>
    %c0_28 = arith.constant 0 : index
    %c0_29 = arith.constant 0 : index
    %c146 = arith.constant 146 : index
    %61 = vector.load %arg1[%c0_28, %c0_29, %c146] : memref<1x1x640xf32, #tpu.memory_space<vmem>>, vector<1x1x384xf32>
    %62 = vector.shape_cast %61 : vector<1x1x384xf32> to vector<1x384xf32>
    %63 = vector.extract_strided_slice %3 {offsets = [0, 7], sizes = [16, 1], strides = [1, 1]} : vector<16x9xf32> to vector<16x1xf32>
    %64 = vector.broadcast %63 : vector<16x1xf32> to vector<16x384xf32>
    %65 = vector.broadcast %62 : vector<1x384xf32> to vector<16x384xf32>
    %66 = arith.mulf %64, %65 : vector<16x384xf32>
    %67 = arith.addf %60, %66 : vector<16x384xf32>
    %c0_30 = arith.constant 0 : index
    %c0_31 = arith.constant 0 : index
    %c147 = arith.constant 147 : index
    %68 = vector.load %arg1[%c0_30, %c0_31, %c147] : memref<1x1x640xf32, #tpu.memory_space<vmem>>, vector<1x1x384xf32>
    %69 = vector.shape_cast %68 : vector<1x1x384xf32> to vector<1x384xf32>
    %70 = vector.extract_strided_slice %3 {offsets = [0, 8], sizes = [16, 1], strides = [1, 1]} : vector<16x9xf32> to vector<16x1xf32>
    %71 = vector.broadcast %70 : vector<16x1xf32> to vector<16x384xf32>
    %72 = vector.broadcast %69 : vector<1x384xf32> to vector<16x384xf32>
    %73 = arith.mulf %71, %72 : vector<16x384xf32>
    %74 = arith.addf %67, %73 : vector<16x384xf32>
    %75 = vector.broadcast %4 : vector<16x1xf32> to vector<16x384xf32>
    %76 = arith.addf %74, %75 : vector<16x384xf32>
    %cst_32 = arith.constant 0.000000e+00 : f32
    %77 = vector.broadcast %cst_32 : f32 to vector<16x384xf32>
    %78 = arith.maximumf %76, %77 : vector<16x384xf32>
    %79 = arith.mulf %78, %2 : vector<16x384xf32>
    %80 = arith.truncf %79 : vector<16x384xf32> to vector<16x384xbf16>
    %c0_33 = arith.constant 0 : index
    %c128_34 = arith.constant 128 : index
    %81 = vector.load %arg10[%c0_33, %c128_34] : memref<16x640xbf16, #tpu.memory_space<vmem>>, vector<16x384xbf16>
    tpu.vector_store %arg10[%c0_33, %c128_34], %80 {strides = array<i32>} : memref<16x640xbf16, #tpu.memory_space<vmem>>, vector<16x384xbf16>,
    %c0_35 = arith.constant 0 : index
    %c109_36 = arith.constant 109 : index
    %82 = vector.load %arg10[%c0_35, %c109_36] : memref<16x640xbf16, #tpu.memory_space<vmem>>, vector<16x384xbf16>
    %c0_37 = arith.constant 0 : index
    %c0_38 = arith.constant 0 : index
    %83 = vector.load %arg11[%c0_37, %c0_38] : memref<144x384xbf16, #tpu.memory_space<vmem>>, vector<16x384xbf16>
    tpu.vector_store %arg11[%c0_37, %c0_38], %82 {strides = array<i32>} : memref<144x384xbf16, #tpu.memory_space<vmem>>, vector<16x384xbf16>,
    %c0_39 = arith.constant 0 : index
    %c110_40 = arith.constant 110 : index
    %84 = vector.load %arg10[%c0_39, %c110_40] : memref<16x640xbf16, #tpu.memory_space<vmem>>, vector<16x384xbf16>
    %c16 = arith.constant 16 : index
    %c0_41 = arith.constant 0 : index
    %85 = vector.load %arg11[%c16, %c0_41] : memref<144x384xbf16, #tpu.memory_space<vmem>>, vector<16x384xbf16>
    tpu.vector_store %arg11[%c16, %c0_41], %84 {strides = array<i32>} : memref<144x384xbf16, #tpu.memory_space<vmem>>, vector<16x384xbf16>,
    %c0_42 = arith.constant 0 : index
    %c111_43 = arith.constant 111 : index
    %86 = vector.load %arg10[%c0_42, %c111_43] : memref<16x640xbf16, #tpu.memory_space<vmem>>, vector<16x384xbf16>
    %c32 = arith.constant 32 : index
    %c0_44 = arith.constant 0 : index
    %87 = vector.load %arg11[%c32, %c0_44] : memref<144x384xbf16, #tpu.memory_space<vmem>>, vector<16x384xbf16>
    tpu.vector_store %arg11[%c32, %c0_44], %86 {strides = array<i32>} : memref<144x384xbf16, #tpu.memory_space<vmem>>, vector<16x384xbf16>,
    %c0_45 = arith.constant 0 : index
    %c127_46 = arith.constant 127 : index
    %88 = vector.load %arg10[%c0_45, %c127_46] : memref<16x640xbf16, #tpu.memory_space<vmem>>, vector<16x384xbf16>
    %c48 = arith.constant 48 : index
    %c0_47 = arith.constant 0 : index
    %89 = vector.load %arg11[%c48, %c0_47] : memref<144x384xbf16, #tpu.memory_space<vmem>>, vector<16x384xbf16>
    tpu.vector_store %arg11[%c48, %c0_47], %88 {strides = array<i32>} : memref<144x384xbf16, #tpu.memory_space<vmem>>, vector<16x384xbf16>,
    %c0_48 = arith.constant 0 : index
    %c128_49 = arith.constant 128 : index
    %90 = vector.load %arg10[%c0_48, %c128_49] : memref<16x640xbf16, #tpu.memory_space<vmem>>, vector<16x384xbf16>
    %c64 = arith.constant 64 : index
    %c0_50 = arith.constant 0 : index
    %91 = vector.load %arg11[%c64, %c0_50] : memref<144x384xbf16, #tpu.memory_space<vmem>>, vector<16x384xbf16>
    tpu.vector_store %arg11[%c64, %c0_50], %90 {strides = array<i32>} : memref<144x384xbf16, #tpu.memory_space<vmem>>, vector<16x384xbf16>,
    %c0_51 = arith.constant 0 : index
    %c129_52 = arith.constant 129 : index
    %92 = vector.load %arg10[%c0_51, %c129_52] : memref<16x640xbf16, #tpu.memory_space<vmem>>, vector<16x384xbf16>
    %c80 = arith.constant 80 : index
    %c0_53 = arith.constant 0 : index
    %93 = vector.load %arg11[%c80, %c0_53] : memref<144x384xbf16, #tpu.memory_space<vmem>>, vector<16x384xbf16>
    tpu.vector_store %arg11[%c80, %c0_53], %92 {strides = array<i32>} : memref<144x384xbf16, #tpu.memory_space<vmem>>, vector<16x384xbf16>,
    %c0_54 = arith.constant 0 : index
    %c145_55 = arith.constant 145 : index
    %94 = vector.load %arg10[%c0_54, %c145_55] : memref<16x640xbf16, #tpu.memory_space<vmem>>, vector<16x384xbf16>
    %c96 = arith.constant 96 : index
    %c0_56 = arith.constant 0 : index
    %95 = vector.load %arg11[%c96, %c0_56] : memref<144x384xbf16, #tpu.memory_space<vmem>>, vector<16x384xbf16>
    tpu.vector_store %arg11[%c96, %c0_56], %94 {strides = array<i32>} : memref<144x384xbf16, #tpu.memory_space<vmem>>, vector<16x384xbf16>,
    %c0_57 = arith.constant 0 : index
    %c146_58 = arith.constant 146 : index
    %96 = vector.load %arg10[%c0_57, %c146_58] : memref<16x640xbf16, #tpu.memory_space<vmem>>, vector<16x384xbf16>
    %c112 = arith.constant 112 : index
    %c0_59 = arith.constant 0 : index
    %97 = vector.load %arg11[%c112, %c0_59] : memref<144x384xbf16, #tpu.memory_space<vmem>>, vector<16x384xbf16>
    tpu.vector_store %arg11[%c112, %c0_59], %96 {strides = array<i32>} : memref<144x384xbf16, #tpu.memory_space<vmem>>, vector<16x384xbf16>,
    %c0_60 = arith.constant 0 : index
    %c147_61 = arith.constant 147 : index
    %98 = vector.load %arg10[%c0_60, %c147_61] : memref<16x640xbf16, #tpu.memory_space<vmem>>, vector<16x384xbf16>
    %c128_62 = arith.constant 128 : index
    %c0_63 = arith.constant 0 : index
    %99 = vector.load %arg11[%c128_62, %c0_63] : memref<144x384xbf16, #tpu.memory_space<vmem>>, vector<16x384xbf16>
    tpu.vector_store %arg11[%c128_62, %c0_63], %98 {strides = array<i32>} : memref<144x384xbf16, #tpu.memory_space<vmem>>, vector<16x384xbf16>,
    %c0_64 = arith.constant 0 : index
    %c0_65 = arith.constant 0 : index
    %100 = vector.load %arg5[%c0_64, %c0_65] : memref<16x144xbf16, #tpu.memory_space<vmem>>, vector<16x144xbf16>
    %c0_66 = arith.constant 0 : index
    %c0_67 = arith.constant 0 : index
    %101 = vector.load %arg11[%c0_66, %c0_67] : memref<144x384xbf16, #tpu.memory_space<vmem>>, vector<144x384xbf16>
    %cst_68 = arith.constant dense<0.000000e+00> : vector<16x384xf32>
    %102 = tpu.matmul %100, %101, %cst_68 {dimension_numbers = #tpu.dot_dimension_numbers<[1], [0], [0], [1], [0, 0, 1, 1], [], []>} : vector<16x144xbf16>, vector<144x384xbf16>, vector<16x384xf32> -> vector<16x384xf32>
    %103 = vector.broadcast %5 : vector<16x1xf32> to vector<16x384xf32>
    %104 = arith.addf %102, %103 : vector<16x384xf32>
    %cst_69 = arith.constant 0.000000e+00 : f32
    %105 = vector.broadcast %cst_69 : f32 to vector<16x384xf32>
    %106 = arith.maximumf %104, %105 : vector<16x384xf32>
    %107 = arith.mulf %106, %2 : vector<16x384xf32>
    %108 = arith.truncf %107 : vector<16x384xf32> to vector<16x384xbf16>
    %c0_70 = arith.constant 0 : index
    %c128_71 = arith.constant 128 : index
    %109 = vector.load %arg10[%c0_70, %c128_71] : memref<16x640xbf16, #tpu.memory_space<vmem>>, vector<16x384xbf16>
    tpu.vector_store %arg10[%c0_70, %c128_71], %108 {strides = array<i32>} : memref<16x640xbf16, #tpu.memory_space<vmem>>, vector<16x384xbf16>,
    %c0_72 = arith.constant 0 : index
    %c0_73 = arith.constant 0 : index
    %110 = vector.load %arg7[%c0_72, %c0_73] : memref<9x16xbf16, #tpu.memory_space<vmem>>, vector<9x16xbf16>
    %c0_74 = arith.constant 0 : index
    %c0_75 = arith.constant 0 : index
    %111 = vector.load %arg10[%c0_74, %c0_75] : memref<16x640xbf16, #tpu.memory_space<vmem>>, vector<16x640xbf16>
    %cst_76 = arith.constant dense<0.000000e+00> : vector<9x640xf32>
    %112 = tpu.matmul %110, %111, %cst_76 {dimension_numbers = #tpu.dot_dimension_numbers<[1], [0], [0], [1], [0, 0, 1, 1], [], []>} : vector<9x16xbf16>, vector<16x640xbf16>, vector<9x640xf32> -> vector<9x640xf32>
    %cst_77 = arith.constant 0.000000e+00 : f32
    %113 = vector.broadcast %cst_77 : f32 to vector<1x384xf32>
    %114 = vector.extract_strided_slice %112 {offsets = [0, 109], sizes = [1, 384], strides = [1, 1]} : vector<9x640xf32> to vector<1x384xf32>
    %115 = arith.addf %113, %114 : vector<1x384xf32>
    %116 = vector.extract_strided_slice %112 {offsets = [1, 110], sizes = [1, 384], strides = [1, 1]} : vector<9x640xf32> to vector<1x384xf32>
    %117 = arith.addf %115, %116 : vector<1x384xf32>
    %118 = vector.extract_strided_slice %112 {offsets = [2, 111], sizes = [1, 384], strides = [1, 1]} : vector<9x640xf32> to vector<1x384xf32>
    %119 = arith.addf %117, %118 : vector<1x384xf32>
    %120 = vector.extract_strided_slice %112 {offsets = [3, 127], sizes = [1, 384], strides = [1, 1]} : vector<9x640xf32> to vector<1x384xf32>
    %121 = arith.addf %119, %120 : vector<1x384xf32>
    %122 = vector.extract_strided_slice %112 {offsets = [4, 128], sizes = [1, 384], strides = [1, 1]} : vector<9x640xf32> to vector<1x384xf32>
    %123 = arith.addf %121, %122 : vector<1x384xf32>
    %124 = vector.extract_strided_slice %112 {offsets = [5, 129], sizes = [1, 384], strides = [1, 1]} : vector<9x640xf32> to vector<1x384xf32>
    %125 = arith.addf %123, %124 : vector<1x384xf32>
    %126 = vector.extract_strided_slice %112 {offsets = [6, 145], sizes = [1, 384], strides = [1, 1]} : vector<9x640xf32> to vector<1x384xf32>
    %127 = arith.addf %125, %126 : vector<1x384xf32>
    %128 = vector.extract_strided_slice %112 {offsets = [7, 146], sizes = [1, 384], strides = [1, 1]} : vector<9x640xf32> to vector<1x384xf32>
    %129 = arith.addf %127, %128 : vector<1x384xf32>
    %130 = vector.extract_strided_slice %112 {offsets = [8, 147], sizes = [1, 384], strides = [1, 1]} : vector<9x640xf32> to vector<1x384xf32>
    %131 = arith.addf %129, %130 : vector<1x384xf32>
    %132 = vector.broadcast %6 : vector<1x1xf32> to vector<1x384xf32>
    %133 = arith.addf %131, %132 : vector<1x384xf32>
    %c0_78 = arith.constant 0 : index
    %c0_79 = arith.constant 0 : index
    %c0_80 = arith.constant 0 : index
    %134 = vector.load %arg9[%c0_78, %c0_79, %c0_80] : memref<1x1x384xf32, #tpu.memory_space<vmem>>, vector<1x1x384xf32>
    %135 = vector.shape_cast %134 : vector<1x1x384xf32> to vector<1x384xf32>
    %136 = vector.shape_cast %133 : vector<1x384xf32> to vector<1x1x384xf32>
    tpu.vector_store %arg9[%c0_78, %c0_79, %c0_80], %136 {strides = array<i32>} : memref<1x1x384xf32, #tpu.memory_space<vmem>>, vector<1x1x384xf32>,
    return
  }
  func.func @transform_0(%arg0: i32) -> (i32, i32, i32) {
    %c0_i32 = arith.constant 0 : i32
    %c0_i32_0 = arith.constant 0 : i32
    %c0_i32_1 = arith.constant 0 : i32
    return %arg0, %c0_i32, %c0_i32_0 : i32, i32, i32
  }
  func.func @transform_1(%arg0: i32) -> (i32, i32) {
    %c0_i32 = arith.constant 0 : i32
    %c0_i32_0 = arith.constant 0 : i32
    %c0_i32_1 = arith.constant 0 : i32
    return %c0_i32, %c0_i32_0 : i32, i32
  }
  func.func @transform_2(%arg0: i32) -> (i32, i32) {
    %c0_i32 = arith.constant 0 : i32
    %c0_i32_0 = arith.constant 0 : i32
    %c0_i32_1 = arith.constant 0 : i32
    return %c0_i32, %c0_i32_0 : i32, i32
  }
  func.func @transform_3(%arg0: i32) -> (i32, i32) {
    %c0_i32 = arith.constant 0 : i32
    %c0_i32_0 = arith.constant 0 : i32
    %c0_i32_1 = arith.constant 0 : i32
    return %c0_i32, %c0_i32_0 : i32, i32
  }
  func.func @transform_4(%arg0: i32) -> (i32, i32) {
    %c0_i32 = arith.constant 0 : i32
    %c0_i32_0 = arith.constant 0 : i32
    %c0_i32_1 = arith.constant 0 : i32
    return %c0_i32, %c0_i32_0 : i32, i32
  }
  func.func @transform_5(%arg0: i32) -> (i32, i32) {
    %c0_i32 = arith.constant 0 : i32
    %c0_i32_0 = arith.constant 0 : i32
    %c0_i32_1 = arith.constant 0 : i32
    return %c0_i32, %c0_i32_0 : i32, i32
  }
  func.func @transform_6(%arg0: i32) -> (i32, i32) {
    %c0_i32 = arith.constant 0 : i32
    %c0_i32_0 = arith.constant 0 : i32
    %c0_i32_1 = arith.constant 0 : i32
    return %c0_i32, %c0_i32_0 : i32, i32
  }
  func.func @transform_7(%arg0: i32) -> (i32, i32) {
    %c0_i32 = arith.constant 0 : i32
    %c0_i32_0 = arith.constant 0 : i32
    %c0_i32_1 = arith.constant 0 : i32
    return %c0_i32, %c0_i32_0 : i32, i32
  }
  func.func @transform_8(%arg0: i32) -> (i32, i32, i32) {
    %c0_i32 = arith.constant 0 : i32
    %c0_i32_0 = arith.constant 0 : i32
    %c0_i32_1 = arith.constant 0 : i32
    return %arg0, %c0_i32, %c0_i32_0 : i32, i32, i32
  }
}

</mosaic_0001>

<llo_original>
// kernel: forward.1
$region0: #{forward.1}
  #allocation0 [shape = 'u32[]', space=smem, size = 0x4, offset = 0x4, fixed_abs, tag = 'smem constant byte address 0x4 - core index']
  #allocation1 [shape = 'u32[144,128]{1,0:T(1,128)}', space=vmem, size = 0x12000, scoped, tag = 'internal scratch']
  #allocation2 [shape = 'bf16[16,640]{1,0:T(16,128)(2,1)}', space=vmem, size = 0x5000, scoped, tag = 'scratch operand']
  #allocation3 [shape = 'bf16[144,384]{1,0:T(16,128)(2,1)}', space=vmem, size = 0x1b000, scoped, tag = 'scratch operand']
  #allocation4 [shape = 'f32[1,1]{1,0:T(1,128)S(1)}', space=vmem, size = 0x200, scoped, tag = 'scoped memory for forward.1']
  %s0 = inlined_call_operand.vmem [shape: f32[2,1,640], index: 0, kind: input, shape index: {}]
  %s1 = inlined_call_operand.vmem [shape: f32[1,384], index: 1, kind: input, shape index: {}]
  %s2 = inlined_call_operand.vmem [shape: f32[16,9], index: 2, kind: input, shape index: {}]
  %s3 = inlined_call_operand.vmem [shape: f32[16,1], index: 3, kind: input, shape index: {}]
  %s4 = inlined_call_operand.vmem [shape: bf16[16,144], index: 4, kind: input, shape index: {}]
  %s5 = inlined_call_operand.vmem [shape: f32[16,1], index: 5, kind: input, shape index: {}]
  %s6 = inlined_call_operand.vmem [shape: bf16[9,16], index: 6, kind: input, shape index: {}]
  %s7 = inlined_call_operand.<no memory space> [shape: f32[1,1], index: 7, kind: input, shape index: {}]
  %s8 = inlined_call_operand.vmem [shape: f32[2,1,384], index: 8, kind: output, shape index: {}]
  %s9 = sld [smem:[#allocation0]]
  $region65: #{forward.1} parent=0
    _
  %s11 = ssub.s32 1, %s9
  %s12 = scalar_select 0, %s11, %s9
  %v13 = vstv %s7
  %14 = vst [vmem:[#allocation4] sm:$0x1] %v13
  loop: start=0, step=1, limit=4
  $region2: #{forward.1} parent=0 // loop_pre_header
    _
  $region3: #{forward.1} parent=0 // loop_header
    %s16 = sphi 0, %s20
    %p17 = scmp.ge.s32.totalorder %s16, 4
    %s26 = sphi 0, %s28
    %s29 = sphi 0, %s26
    %s30 = sphi 0, %s29
    %s46 = sphi 0, %s30
    %s50 = sphi 0, %s50
    %s52 = sphi 0, %s50
    %s53 = sphi 0, %s52
    %s67 = sphi 0, %s53
    %s71 = sphi 0, %s71
    %s73 = sphi 0, %s71
    %s74 = sphi 0, %s73
    %s88 = sphi 0, %s74
    %s92 = sphi 0, %s92
    %s94 = sphi 0, %s92
    %s95 = sphi 0, %s94
    %s109 = sphi 0, %s95
    %s113 = sphi 0, %s113
    %s115 = sphi 0, %s113
    %s116 = sphi 0, %s115
    %s130 = sphi 0, %s116
    %s134 = sphi 0, %s134
    %s136 = sphi 0, %s134
    %s137 = sphi 0, %s136
    %s151 = sphi 0, %s137
    %s155 = sphi 0, %s155
    %s157 = sphi 0, %s155
    %s158 = sphi 0, %s157
    %s172 = sphi 0, %s158
    %s176 = sphi 0, %s176
    %s178 = sphi 0, %s176
    %s179 = sphi 0, %s178
    %s193 = sphi 0, %s179
    %s199 = sphi 0, %s201
    %s202 = sphi 0, %s199
    %s203 = sphi 0, %s202
    %s219 = sphi 0, %s203
  $region4: #{forward.1} parent=0 // loop_header_branch
    %19 = sbr.rel (%p17) target = $region8
  $region5: #{forward.1} parent=0 // loop_body
    %s21 = ssub.s32 %s16, 1
    %s22 = ssub.s32 %s16, 2
    %s23 = sadd.s32 %s16, 1
    %s24 = ssub.s32 %s16, %s23
    %p25 = scmp.eq.s32.totalorder %s24, 0
    %s27 = sadd.s32 %s26, 1
    %s28 = scalar_select %p25, %s26, %s27
    %p31 = pneg %p25
    %p32 = scmp.eq.s32.totalorder %s16, 1
    %p33 = por %p31, %p32
    %p34 = scmp.ne.s32.totalorder %s26, %s29
    %p35 = scmp.eq.s32.totalorder %s16, 0
    %p36 = por %p34, %p35
    %p37 = scmp.ne.s32.totalorder %s26, %s29
    %p38 = scmp.eq.s32.totalorder %s21, 1
    %p39 = por %p37, %p38
    %p40 = scmp.ne.s32.totalorder %s29, %s30
    %p41 = scmp.eq.s32.totalorder %s21, 0
    %p42 = por %p40, %p41
    %p43 = scmp.ne.s32.totalorder %s29, %s30
    %p44 = scmp.eq.s32.totalorder %s22, 1
    %p45 = por %p43, %p44
    %p47 = scmp.ne.s32.totalorder %s30, %s46
    %p48 = scmp.eq.s32.totalorder %s22, 0
    %p49 = por %p47, %p48
    %s51 = sadd.s32 %s50, 1
    %p54 = scmp.eq.s32.totalorder %s16, 1
    %p55 = scmp.ne.s32.totalorder %s50, %s52
    %p56 = scmp.eq.s32.totalorder %s16, 0
    %p57 = por %p55, %p56
    %p58 = scmp.ne.s32.totalorder %s50, %s52
    %p59 = scmp.eq.s32.totalorder %s21, 1
    %p60 = por %p58, %p59
    %p61 = scmp.ne.s32.totalorder %s52, %s53
    %p62 = scmp.eq.s32.totalorder %s21, 0
    %p63 = por %p61, %p62
    %p64 = scmp.ne.s32.totalorder %s52, %s53
    %p65 = scmp.eq.s32.totalorder %s22, 1
    %p66 = por %p64, %p65
    %p68 = scmp.ne.s32.totalorder %s53, %s67
    %p69 = scmp.eq.s32.totalorder %s22, 0
    %p70 = por %p68, %p69
    %s72 = sadd.s32 %s71, 1
    %p75 = scmp.eq.s32.totalorder %s16, 1
    %p76 = scmp.ne.s32.totalorder %s71, %s73
    %p77 = scmp.eq.s32.totalorder %s16, 0
    %p78 = por %p76, %p77
    %p79 = scmp.ne.s32.totalorder %s71, %s73
    %p80 = scmp.eq.s32.totalorder %s21, 1
    %p81 = por %p79, %p80
    %p82 = scmp.ne.s32.totalorder %s73, %s74
    %p83 = scmp.eq.s32.totalorder %s21, 0
    %p84 = por %p82, %p83
    %p85 = scmp.ne.s32.totalorder %s73, %s74
    %p86 = scmp.eq.s32.totalorder %s22, 1
    %p87 = por %p85, %p86
    %p89 = scmp.ne.s32.totalorder %s74, %s88
    %p90 = scmp.eq.s32.totalorder %s22, 0
    %p91 = por %p89, %p90
    %s93 = sadd.s32 %s92, 1
    %p96 = scmp.eq.s32.totalorder %s16, 1
    %p97 = scmp.ne.s32.totalorder %s92, %s94
    %p98 = scmp.eq.s32.totalorder %s16, 0
    %p99 = por %p97, %p98
    %p100 = scmp.ne.s32.totalorder %s92, %s94
    %p101 = scmp.eq.s32.totalorder %s21, 1
    %p102 = por %p100, %p101
    %p103 = scmp.ne.s32.totalorder %s94, %s95
    %p104 = scmp.eq.s32.totalorder %s21, 0
    %p105 = por %p103, %p104
    %p106 = scmp.ne.s32.totalorder %s94, %s95
    %p107 = scmp.eq.s32.totalorder %s22, 1
    %p108 = por %p106, %p107
    %p110 = scmp.ne.s32.totalorder %s95, %s109
    %p111 = scmp.eq.s32.totalorder %s22, 0
    %p112 = por %p110, %p111
    %s114 = sadd.s32 %s113, 1
    %p117 = scmp.eq.s32.totalorder %s16, 1
    %p118 = scmp.ne.s32.totalorder %s113, %s115
    %p119 = scmp.eq.s32.totalorder %s16, 0
    %p120 = por %p118, %p119
    %p121 = scmp.ne.s32.totalorder %s113, %s115
    %p122 = scmp.eq.s32.totalorder %s21, 1
    %p123 = por %p121, %p122
    %p124 = scmp.ne.s32.totalorder %s115, %s116
    %p125 = scmp.eq.s32.totalorder %s21, 0
    %p126 = por %p124, %p125
    %p127 = scmp.ne.s32.totalorder %s115, %s116
    %p128 = scmp.eq.s32.totalorder %s22, 1
    %p129 = por %p127, %p128
    %p131 = scmp.ne.s32.totalorder %s116, %s130
    %p132 = scmp.eq.s32.totalorder %s22, 0
    %p133 = por %p131, %p132
    %s135 = sadd.s32 %s134, 1
    %p138 = scmp.eq.s32.totalorder %s16, 1
    %p139 = scmp.ne.s32.totalorder %s134, %s136
    %p140 = scmp.eq.s32.totalorder %s16, 0
    %p141 = por %p139, %p140
    %p142 = scmp.ne.s32.totalorder %s134, %s136
    %p143 = scmp.eq.s32.totalorder %s21, 1
    %p144 = por %p142, %p143
    %p145 = scmp.ne.s32.totalorder %s136, %s137
    %p146 = scmp.eq.s32.totalorder %s21, 0
    %p147 = por %p145, %p146
    %p148 = scmp.ne.s32.totalorder %s136, %s137
    %p149 = scmp.eq.s32.totalorder %s22, 1
    %p150 = por %p148, %p149
    %p152 = scmp.ne.s32.totalorder %s137, %s151
    %p153 = scmp.eq.s32.totalorder %s22, 0
    %p154 = por %p152, %p153
    %s156 = sadd.s32 %s155, 1
    %p159 = scmp.eq.s32.totalorder %s16, 1
    %p160 = scmp.ne.s32.totalorder %s155, %s157
    %p161 = scmp.eq.s32.totalorder %s16, 0
    %p162 = por %p160, %p161
    %p163 = scmp.ne.s32.totalorder %s155, %s157
    %p164 = scmp.eq.s32.totalorder %s21, 1
    %p165 = por %p163, %p164
    %p166 = scmp.ne.s32.totalorder %s157, %s158
    %p167 = scmp.eq.s32.totalorder %s21, 0
    %p168 = por %p166, %p167
    %p169 = scmp.ne.s32.totalorder %s157, %s158
    %p170 = scmp.eq.s32.totalorder %s22, 1
    %p171 = por %p169, %p170
    %p173 = scmp.ne.s32.totalorder %s158, %s172
    %p174 = scmp.eq.s32.totalorder %s22, 0
    %p175 = por %p173, %p174
    %s177 = sadd.s32 %s176, 1
    %p180 = scmp.eq.s32.totalorder %s16, 1
    %p181 = scmp.ne.s32.totalorder %s176, %s178
    %p182 = scmp.eq.s32.totalorder %s16, 0
    %p183 = por %p181, %p182
    %p184 = scmp.ne.s32.totalorder %s176, %s178
    %p185 = scmp.eq.s32.totalorder %s21, 1
    %p186 = por %p184, %p185
    %p187 = scmp.ne.s32.totalorder %s178, %s179
    %p188 = scmp.eq.s32.totalorder %s21, 0
    %p189 = por %p187, %p188
    %p190 = scmp.ne.s32.totalorder %s178, %s179
    %p191 = scmp.eq.s32.totalorder %s22, 1
    %p192 = por %p190, %p191
    %p194 = scmp.ne.s32.totalorder %s179, %s193
    %p195 = scmp.eq.s32.totalorder %s22, 0
    %p196 = por %p194, %p195
    %s197 = ssub.s32 %s16, %s23
    %p198 = scmp.eq.s32.totalorder %s197, 0
    %s200 = sadd.s32 %s199, 1
    %s201 = scalar_select %p198, %s199, %s200
    %p204 = pneg %p198
    %p205 = scmp.eq.s32.totalorder %s16, 1
    %p206 = por %p204, %p205
    %p207 = scmp.ne.s32.totalorder %s199, %s202
    %p208 = scmp.eq.s32.totalorder %s16, 0
    %p209 = por %p207, %p208
    %p210 = scmp.ne.s32.totalorder %s199, %s202
    %p211 = scmp.eq.s32.totalorder %s21, 1
    %p212 = por %p210, %p211
    %p213 = scmp.ne.s32.totalorder %s202, %s203
    %p214 = scmp.eq.s32.totalorder %s21, 0
    %p215 = por %p213, %p214
    %p216 = scmp.ne.s32.totalorder %s202, %s203
    %p217 = scmp.eq.s32.totalorder %s22, 1
    %p218 = por %p216, %p217
    %p220 = scmp.ne.s32.totalorder %s203, %s219
    %p221 = scmp.eq.s32.totalorder %s22, 0
    %p222 = por %p220, %p221
    %p223 = scmp.le.s32.totalorder 1, %s16
    %p224 = scmp.lt.s32.totalorder %s16, 3
    %p225 = pnand %p223, %p224
    %p226 = pneg %p225
    // Predicated region
    $region9: #{forward.1} parent=5 // pred_check
      _
    $region10: #{forward.1} parent=5 // pred_check_branch
      %228 = sbr.rel (%p225) target = $region12
    $region11: #{forward.1} parent=5 // pred_region
      %s229 = ssub.s32 %s16, 1
      // Predicated region
      $region13: #{forward.1} parent=11 // pred_check
        %p230 = pneg %p63
      $region14: #{forward.1} parent=11 // pred_check_branch
        %232 = sbr.rel (%p230) target = $region16
      $region15: #{forward.1} parent=11 // pred_region
        _
      $region16: #{forward.1} parent=11 // pred_fallthru
        _
      // Predicated region
      $region17: #{forward.1} parent=11 // pred_check
        %p233 = pneg %p84
      $region18: #{forward.1} parent=11 // pred_check_branch
        %235 = sbr.rel (%p233) target = $region20
      $region19: #{forward.1} parent=11 // pred_region
        _
      $region20: #{forward.1} parent=11 // pred_fallthru
        _
      // Predicated region
      $region21: #{forward.1} parent=11 // pred_check
        %p236 = pneg %p105
      $region22: #{forward.1} parent=11 // pred_check_branch
        %238 = sbr.rel (%p236) target = $region24
      $region23: #{forward.1} parent=11 // pred_region
        _
      $region24: #{forward.1} parent=11 // pred_fallthru
        _
      // Predicated region
      $region25: #{forward.1} parent=11 // pred_check
        %p239 = pneg %p126
      $region26: #{forward.1} parent=11 // pred_check_branch
        %241 = sbr.rel (%p239) target = $region28
      $region27: #{forward.1} parent=11 // pred_region
        _
      $region28: #{forward.1} parent=11 // pred_fallthru
        _
      // Predicated region
      $region29: #{forward.1} parent=11 // pred_check
        %p242 = pneg %p147
      $region30: #{forward.1} parent=11 // pred_check_branch
        %244 = sbr.rel (%p242) target = $region32
      $region31: #{forward.1} parent=11 // pred_region
        _
      $region32: #{forward.1} parent=11 // pred_fallthru
        _
      // Predicated region
      $region33: #{forward.1} parent=11 // pred_check
        %p245 = pneg %p168
      $region34: #{forward.1} parent=11 // pred_check_branch
        %247 = sbr.rel (%p245) target = $region36
      $region35: #{forward.1} parent=11 // pred_region
        _
      $region36: #{forward.1} parent=11 // pred_fallthru
        _
      // Predicated region
      $region37: #{forward.1} parent=11 // pred_check
        %p248 = pneg %p189
      $region38: #{forward.1} parent=11 // pred_check_branch
        %250 = sbr.rel (%p248) target = $region40
      $region39: #{forward.1} parent=11 // pred_region
        _
      $region40: #{forward.1} parent=11 // pred_fallthru
        _
    $region12: #{forward.1} parent=5 // pred_fallthru
      _
    %p251 = scmp.lt.s32.totalorder %s16, 2
    // Predicated region
    $region41: #{forward.1} parent=5 // pred_check
      %p252 = pneg %p251
    $region42: #{forward.1} parent=5 // pred_check_branch
      %254 = sbr.rel (%p252) target = $region44
    $region43: #{forward.1} parent=5 // pred_region
      // Predicated region
      $region45: #{forward.1} parent=43 // pred_check
        %p255 = pneg %p36
      $region46: #{forward.1} parent=43 // pred_check_branch
        %257 = sbr.rel (%p255) target = $region48
      $region47: #{forward.1} parent=43 // pred_region
        %p258 = scmp.lt.s32.totalorder %s16, 1
        %s259 = scalar_select %p258, %s16, 1
        %s260 = smul.addr %s259, 5
        %s261 = scalar_lea.vmem %s0, %s260
      $region48: #{forward.1} parent=43 // pred_fallthru
        _
    $region44: #{forward.1} parent=5 // pred_fallthru
      _
    %p262 = scmp.le.s32.totalorder 1, %s16
    %p263 = scmp.lt.s32.totalorder %s16, 3
    %p264 = pnand %p262, %p263
    %p265 = pneg %p264
    // Predicated region
    $region49: #{forward.1} parent=5 // pred_check
      _
    $region50: #{forward.1} parent=5 // pred_check_branch
      %267 = sbr.rel (%p264) target = $region52
    $region51: #{forward.1} parent=5 // pred_region
      %s268 = ssub.s32 %s16, 1
      %p269 = scmp.lt.s32.totalorder %s21, 1
      %s270 = scalar_select %p269, %s21, 1
      %s271 = smul.addr %s270, 5
      %s272 = scalar_lea.vmem %s0, %s271
      %p273 = pneg %p42
      %p274 = pneg %p39
      %p275 = pneg %p63
      %p276 = pneg %p60
      %p277 = pneg %p84
      %p278 = pneg %p81
      %p279 = pneg %p105
      %p280 = pneg %p102
      %p281 = pneg %p126
      %p282 = pneg %p123
      %p283 = pneg %p147
      %p284 = pneg %p144
      %p285 = pneg %p168
      %p286 = pneg %p165
      %p287 = pneg %p189
      %p288 = pneg %p186
      %p289 = pneg %p215
      %p290 = pneg %p212
      %p291 = scmp.lt.s32.totalorder %s21, 1
      %s292 = scalar_select %p291, %s21, 1
      %s293 = smul.addr %s292, 3
      %s294 = scalar_lea.vmem %s8, %s293
      %p295 = scmp.lt.s32.totalorder %s21, 1
      %s296 = scalar_select %p295, %s21, 1
      %s297 = smul.addr %s296, 5
      %s298 = scalar_lea.vmem %s0, %s297
      %p299 = scmp.lt.s32.totalorder %s21, 1
      %s300 = scalar_select %p299, %s21, 1
      %s301 = smul.addr %s300, 3
      %s302 = scalar_lea.vmem %s8, %s301
      %v304 = vld [vmem:[%s1] sm:$0x7]
      %v306 = vlaneseq
      %v307 = vshrl.u32 %v306, 7
      %v308 = vsub.s32 0, %v307
      %v309 = vrot.slane %v304, %v308
      %v310 = vlaneseq
      %v311 = vshrl.u32 %v310, 7
      %v312 = vsub.s32 1, %v311
      %v313 = vrot.slane %v304, %v312
      %v314 = vlaneseq
      %v315 = vshrl.u32 %v314, 7
      %v316 = vsub.s32 2, %v315
      %v317 = vrot.slane %v304, %v316
      %v321 = vld [vmem:[%s2] sm:$0xff]
      %v322 = vld [vmem:[%s2 + $0x8] sm:$0xff]
      %v323 = vld [vmem:[%s3] sm:$0xff]
      %v324 = vld [vmem:[%s3 + $0x8] sm:$0xff]
      %v325 = vld [vmem:[%s5] sm:$0xff]
      %v326 = vld [vmem:[%s5 + $0x8] sm:$0xff]
      %v327 = vld [vmem:[#allocation4] sm:$0x1]
      %328 = vst [vmem:[#allocation2] sm:$0xff] 0
      %329 = vst [vmem:[#allocation2 + $0x20] sm:$0xff] 0
      %v330 = vld [vmem:[%s298] sm:$0xf]
      %332 = vset.pattern.permute.xlu0 0
      %333 = vperm.xlu0 %332, %v321
      %v334 = vpop.permute.xlu0 %333
      %337 = vset.pattern.permute.xlu0 0
      %338 = vperm.xlu0 %337, %v322
      %v339 = vpop.permute.xlu0 %338
      %v342 = vlaneseq
      %v343 = vshrl.u32 %v342, 7
      %v344 = vsub.s32 0, %v343
      %v345 = vrot.slane %v330, %v344
      %v346 = vlaneseq
      %v347 = vshrl.u32 %v346, 7
      %v348 = vsub.s32 1, %v347
      %v349 = vrot.slane %v330, %v348
      %v350 = vlaneseq
      %v351 = vshrl.u32 %v350, 7
      %v352 = vsub.s32 2, %v351
      %v353 = vrot.slane %v330, %v352
      %v354 = vlaneseq
      %v355 = vshrl.u32 %v354, 7
      %v356 = vsub.s32 3, %v355
      %v357 = vrot.slane %v330, %v356
      %v362 = vmul.f32 %v334, %v345
      %v363 = vmul.f32 %v334, %v349
      %v364 = vmul.f32 %v334, %v353
      %v365 = vmul.f32 %v334, %v357
      %v366 = vmul.f32 %v339, %v345
      %v367 = vmul.f32 %v339, %v349
      %v368 = vmul.f32 %v339, %v353
      %v369 = vmul.f32 %v339, %v357
      %v370 = vadd.f32 %v362, 0.0
      %v371 = vadd.f32 %v363, 0.0
      %v372 = vadd.f32 %v364, 0.0
      %v373 = vadd.f32 %v365, 0.0
      %v374 = vadd.f32 %v366, 0.0
      %v375 = vadd.f32 %v367, 0.0
      %v376 = vadd.f32 %v368, 0.0
      %v377 = vadd.f32 %v369, 0.0
      %378 = vset.pattern.permute.xlu0 1
      %379 = vperm.xlu0 %378, %v321
      %v380 = vpop.permute.xlu0 %379
      %382 = vset.pattern.permute.xlu0 1
      %383 = vperm.xlu0 %382, %v322
      %v384 = vpop.permute.xlu0 %383
      %v386 = vmul.f32 %v380, %v345
      %v387 = vmul.f32 %v380, %v349
      %v388 = vmul.f32 %v380, %v353
      %v389 = vmul.f32 %v380, %v357
      %v390 = vmul.f32 %v384, %v345
      %v391 = vmul.f32 %v384, %v349
      %v392 = vmul.f32 %v384, %v353
      %v393 = vmul.f32 %v384, %v357
      %402 = vrot.lane.b32.xlu0 %v386, 127
      %v403 = vpop.permute.xlu0 %402
      %404 = vrot.lane.b32.xlu0 %v387, 127
      %v405 = vpop.permute.xlu0 %404
      %406 = vrot.lane.b32.xlu0 %v388, 127
      %v407 = vpop.permute.xlu0 %406
      %408 = vrot.lane.b32.xlu0 %v389, 127
      %v409 = vpop.permute.xlu0 %408
      %410 = vrot.lane.b32.xlu0 %v390, 127
      %v411 = vpop.permute.xlu0 %410
      %412 = vrot.lane.b32.xlu0 %v391, 127
      %v413 = vpop.permute.xlu0 %412
      %414 = vrot.lane.b32.xlu0 %v392, 127
      %v415 = vpop.permute.xlu0 %414
      %416 = vrot.lane.b32.xlu0 %v393, 127
      %v417 = vpop.permute.xlu0 %416
      %vm418 = vcmask 1039360
      %v419 = vsel %vm418, %v403, %v405
      %v420 = vsel %vm418, %v405, %v407
      %v421 = vsel %vm418, %v407, %v409
      %v422 = vsel %vm418, %v411, %v413
      %v423 = vsel %vm418, %v413, %v415
      %v424 = vsel %vm418, %v415, %v417
      %v433 = vadd.f32 %v370, %v419
      %v434 = vadd.f32 %v371, %v420
      %v435 = vadd.f32 %v372, %v421
      %v436 = vadd.f32 %v373, %v409
      %v437 = vadd.f32 %v374, %v422
      %v438 = vadd.f32 %v375, %v423
      %v439 = vadd.f32 %v376, %v424
      %v440 = vadd.f32 %v377, %v417
      %441 = vset.pattern.permute.xlu0 2
      %442 = vperm.xlu0 %441, %v321
      %v443 = vpop.permute.xlu0 %442
      %445 = vset.pattern.permute.xlu0 2
      %446 = vperm.xlu0 %445, %v322
      %v447 = vpop.permute.xlu0 %446
      %v449 = vmul.f32 %v443, %v345
      %v450 = vmul.f32 %v443, %v349
      %v451 = vmul.f32 %v443, %v353
      %v452 = vmul.f32 %v443, %v357
      %v453 = vmul.f32 %v447, %v345
      %v454 = vmul.f32 %v447, %v349
      %v455 = vmul.f32 %v447, %v353
      %v456 = vmul.f32 %v447, %v357
      %465 = vrot.lane.b32.xlu0 %v449, 126
      %v466 = vpop.permute.xlu0 %465
      %467 = vrot.lane.b32.xlu0 %v450, 126
      %v468 = vpop.permute.xlu0 %467
      %469 = vrot.lane.b32.xlu0 %v451, 126
      %v470 = vpop.permute.xlu0 %469
      %471 = vrot.lane.b32.xlu0 %v452, 126
      %v472 = vpop.permute.xlu0 %471
      %473 = vrot.lane.b32.xlu0 %v453, 126
      %v474 = vpop.permute.xlu0 %473
      %475 = vrot.lane.b32.xlu0 %v454, 126
      %v476 = vpop.permute.xlu0 %475
      %477 = vrot.lane.b32.xlu0 %v455, 126
      %v478 = vpop.permute.xlu0 %477
      %479 = vrot.lane.b32.xlu0 %v456, 126
      %v480 = vpop.permute.xlu0 %479
      %vm481 = vcmask 1031168
      %v482 = vsel %vm481, %v466, %v468
      %v483 = vsel %vm481, %v468, %v470
      %v484 = vsel %vm481, %v470, %v472
      %v485 = vsel %vm481, %v474, %v476
      %v486 = vsel %vm481, %v476, %v478
      %v487 = vsel %vm481, %v478, %v480
      %v496 = vadd.f32 %v433, %v482
      %v497 = vadd.f32 %v434, %v483
      %v498 = vadd.f32 %v435, %v484
      %v499 = vadd.f32 %v436, %v472
      %v500 = vadd.f32 %v437, %v485
      %v501 = vadd.f32 %v438, %v486
      %v502 = vadd.f32 %v439, %v487
      %v503 = vadd.f32 %v440, %v480
      %504 = vset.pattern.permute.xlu0 3
      %505 = vperm.xlu0 %504, %v321
      %v506 = vpop.permute.xlu0 %505
      %508 = vset.pattern.permute.xlu0 3
      %509 = vperm.xlu0 %508, %v322
      %v510 = vpop.permute.xlu0 %509
      %v512 = vmul.f32 %v506, %v345
      %v513 = vmul.f32 %v506, %v349
      %v514 = vmul.f32 %v506, %v353
      %v515 = vmul.f32 %v506, %v357
      %v516 = vmul.f32 %v510, %v345
      %v517 = vmul.f32 %v510, %v349
      %v518 = vmul.f32 %v510, %v353
      %v519 = vmul.f32 %v510, %v357
      %528 = vrot.lane.b32.xlu0 %v512, 110
      %v529 = vpop.permute.xlu0 %528
      %530 = vrot.lane.b32.xlu0 %v513, 110
      %v531 = vpop.permute.xlu0 %530
      %532 = vrot.lane.b32.xlu0 %v514, 110
      %v533 = vpop.permute.xlu0 %532
      %534 = vrot.lane.b32.xlu0 %v515, 110
      %v535 = vpop.permute.xlu0 %534
      %536 = vrot.lane.b32.xlu0 %v516, 110
      %v537 = vpop.permute.xlu0 %536
      %538 = vrot.lane.b32.xlu0 %v517, 110
      %v539 = vpop.permute.xlu0 %538
      %540 = vrot.lane.b32.xlu0 %v518, 110
      %v541 = vpop.permute.xlu0 %540
      %542 = vrot.lane.b32.xlu0 %v519, 110
      %v543 = vpop.permute.xlu0 %542
      %vm544 = vcmask 900096
      %v545 = vsel %vm544, %v529, %v531
      %v546 = vsel %vm544, %v531, %v533
      %v547 = vsel %vm544, %v533, %v535
      %v548 = vsel %vm544, %v537, %v539
      %v549 = vsel %vm544, %v539, %v541
      %v550 = vsel %vm544, %v541, %v543
      %v559 = vadd.f32 %v496, %v545
      %v560 = vadd.f32 %v497, %v546
      %v561 = vadd.f32 %v498, %v547
      %v562 = vadd.f32 %v499, %v535
      %v563 = vadd.f32 %v500, %v548
      %v564 = vadd.f32 %v501, %v549
      %v565 = vadd.f32 %v502, %v550
      %v566 = vadd.f32 %v503, %v543
      %v567 = vld [vmem:[%s298 + $0x1] sm:$0x7]
      %568 = vset.pattern.permute.xlu0 4
      %569 = vperm.xlu0 %568, %v321
      %v570 = vpop.permute.xlu0 %569
      %572 = vset.pattern.permute.xlu0 4
      %573 = vperm.xlu0 %572, %v322
      %v574 = vpop.permute.xlu0 %573
      %v577 = vlaneseq
      %v578 = vshrl.u32 %v577, 7
      %v579 = vsub.s32 0, %v578
      %v580 = vrot.slane %v567, %v579
      %v581 = vlaneseq
      %v582 = vshrl.u32 %v581, 7
      %v583 = vsub.s32 1, %v582
      %v584 = vrot.slane %v567, %v583
      %v585 = vlaneseq
      %v586 = vshrl.u32 %v585, 7
      %v587 = vsub.s32 2, %v586
      %v588 = vrot.slane %v567, %v587
      %v592 = vmul.f32 %v570, %v580
      %v593 = vmul.f32 %v570, %v584
      %v594 = vmul.f32 %v570, %v588
      %v595 = vmul.f32 %v574, %v580
      %v596 = vmul.f32 %v574, %v584
      %v597 = vmul.f32 %v574, %v588
      %604 = vrot.lane.b32.xlu0 %v592, 109
      %v605 = vpop.permute.xlu0 %604
      %606 = vrot.lane.b32.xlu0 %v593, 109
      %v607 = vpop.permute.xlu0 %606
      %608 = vrot.lane.b32.xlu0 %v594, 109
      %v609 = vpop.permute.xlu0 %608
      %610 = vrot.lane.b32.xlu0 %v595, 109
      %v611 = vpop.permute.xlu0 %610
      %612 = vrot.lane.b32.xlu0 %v596, 109
      %v613 = vpop.permute.xlu0 %612
      %614 = vrot.lane.b32.xlu0 %v597, 109
      %v615 = vpop.permute.xlu0 %614
      %vm616 = vcmask 891904
      %v617 = vsel %vm616, %v605, %v607
      %v618 = vsel %vm616, %v607, %v609
      %v619 = vsel %vm616, %v611, %v613
      %v620 = vsel %vm616, %v613, %v615
      %v629 = vadd.f32 %v559, %v605
      %v630 = vadd.f32 %v560, %v617
      %v631 = vadd.f32 %v561, %v618
      %v632 = vadd.f32 %v562, %v609
      %v633 = vadd.f32 %v563, %v611
      %v634 = vadd.f32 %v564, %v619
      %v635 = vadd.f32 %v565, %v620
      %v636 = vadd.f32 %v566, %v615
      %v637 = vld [vmem:[%s298 + $0x1] sm:$0xf]
      %638 = vset.pattern.permute.xlu0 5
      %639 = vperm.xlu0 %638, %v321
      %v640 = vpop.permute.xlu0 %639
      %642 = vset.pattern.permute.xlu0 5
      %643 = vperm.xlu0 %642, %v322
      %v644 = vpop.permute.xlu0 %643
      %v647 = vlaneseq
      %v648 = vshrl.u32 %v647, 7
      %v649 = vsub.s32 0, %v648
      %v650 = vrot.slane %v637, %v649
      %v651 = vlaneseq
      %v652 = vshrl.u32 %v651, 7
      %v653 = vsub.s32 1, %v652
      %v654 = vrot.slane %v637, %v653
      %v655 = vlaneseq
      %v656 = vshrl.u32 %v655, 7
      %v657 = vsub.s32 2, %v656
      %v658 = vrot.slane %v637, %v657
      %v659 = vlaneseq
      %v660 = vshrl.u32 %v659, 7
      %v661 = vsub.s32 3, %v660
      %v662 = vrot.slane %v637, %v661
      %v667 = vmul.f32 %v640, %v650
      %v668 = vmul.f32 %v640, %v654
      %v669 = vmul.f32 %v640, %v658
      %v670 = vmul.f32 %v640, %v662
      %v671 = vmul.f32 %v644, %v650
      %v672 = vmul.f32 %v644, %v654
      %v673 = vmul.f32 %v644, %v658
      %v674 = vmul.f32 %v644, %v662
      %683 = vrot.lane.b32.xlu0 %v667, 108
      %v684 = vpop.permute.xlu0 %683
      %685 = vrot.lane.b32.xlu0 %v668, 108
      %v686 = vpop.permute.xlu0 %685
      %687 = vrot.lane.b32.xlu0 %v669, 108
      %v688 = vpop.permute.xlu0 %687
      %689 = vrot.lane.b32.xlu0 %v670, 108
      %v690 = vpop.permute.xlu0 %689
      %691 = vrot.lane.b32.xlu0 %v671, 108
      %v692 = vpop.permute.xlu0 %691
      %693 = vrot.lane.b32.xlu0 %v672, 108
      %v694 = vpop.permute.xlu0 %693
      %695 = vrot.lane.b32.xlu0 %v673, 108
      %v696 = vpop.permute.xlu0 %695
      %697 = vrot.lane.b32.xlu0 %v674, 108
      %v698 = vpop.permute.xlu0 %697
      %vm699 = vcmask 883712
      %v700 = vsel %vm699, %v684, %v686
      %v701 = vsel %vm699, %v686, %v688
      %v702 = vsel %vm699, %v688, %v690
      %v703 = vsel %vm699, %v692, %v694
      %v704 = vsel %vm699, %v694, %v696
      %v705 = vsel %vm699, %v696, %v698
      %v714 = vadd.f32 %v629, %v684
      %v715 = vadd.f32 %v630, %v700
      %v716 = vadd.f32 %v631, %v701
      %v717 = vadd.f32 %v632, %v702
      %v718 = vadd.f32 %v633, %v692
      %v719 = vadd.f32 %v634, %v703
      %v720 = vadd.f32 %v635, %v704
      %v721 = vadd.f32 %v636, %v705
      %722 = vset.pattern.permute.xlu0 6
      %723 = vperm.xlu0 %722, %v321
      %v724 = vpop.permute.xlu0 %723
      %726 = vset.pattern.permute.xlu0 6
      %727 = vperm.xlu0 %726, %v322
      %v728 = vpop.permute.xlu0 %727
      %v730 = vmul.f32 %v724, %v650
      %v731 = vmul.f32 %v724, %v654
      %v732 = vmul.f32 %v724, %v658
      %v733 = vmul.f32 %v724, %v662
      %v734 = vmul.f32 %v728, %v650
      %v735 = vmul.f32 %v728, %v654
      %v736 = vmul.f32 %v728, %v658
      %v737 = vmul.f32 %v728, %v662
      %746 = vrot.lane.b32.xlu0 %v730, 92
      %v747 = vpop.permute.xlu0 %746
      %748 = vrot.lane.b32.xlu0 %v731, 92
      %v749 = vpop.permute.xlu0 %748
      %750 = vrot.lane.b32.xlu0 %v732, 92
      %v751 = vpop.permute.xlu0 %750
      %752 = vrot.lane.b32.xlu0 %v733, 92
      %v753 = vpop.permute.xlu0 %752
      %754 = vrot.lane.b32.xlu0 %v734, 92
      %v755 = vpop.permute.xlu0 %754
      %756 = vrot.lane.b32.xlu0 %v735, 92
      %v757 = vpop.permute.xlu0 %756
      %758 = vrot.lane.b32.xlu0 %v736, 92
      %v759 = vpop.permute.xlu0 %758
      %760 = vrot.lane.b32.xlu0 %v737, 92
      %v761 = vpop.permute.xlu0 %760
      %vm762 = vcmask 752640
      %v763 = vsel %vm762, %v747, %v749
      %v764 = vsel %vm762, %v749, %v751
      %v765 = vsel %vm762, %v751, %v753
      %v766 = vsel %vm762, %v755, %v757
      %v767 = vsel %vm762, %v757, %v759
      %v768 = vsel %vm762, %v759, %v761
      %v777 = vadd.f32 %v714, %v747
      %v778 = vadd.f32 %v715, %v763
      %v779 = vadd.f32 %v716, %v764
      %v780 = vadd.f32 %v717, %v765
      %v781 = vadd.f32 %v718, %v755
      %v782 = vadd.f32 %v719, %v766
      %v783 = vadd.f32 %v720, %v767
      %v784 = vadd.f32 %v721, %v768
      %785 = vset.pattern.permute.xlu0 7
      %786 = vperm.xlu0 %785, %v321
      %v787 = vpop.permute.xlu0 %786
      %789 = vset.pattern.permute.xlu0 7
      %790 = vperm.xlu0 %789, %v322
      %v791 = vpop.permute.xlu0 %790
      %v793 = vmul.f32 %v787, %v650
      %v794 = vmul.f32 %v787, %v654
      %v795 = vmul.f32 %v787, %v658
      %v796 = vmul.f32 %v787, %v662
      %v797 = vmul.f32 %v791, %v650
      %v798 = vmul.f32 %v791, %v654
      %v799 = vmul.f32 %v791, %v658
      %v800 = vmul.f32 %v791, %v662
      %809 = vrot.lane.b32.xlu0 %v793, 91
      %v810 = vpop.permute.xlu0 %809
      %811 = vrot.lane.b32.xlu0 %v794, 91
      %v812 = vpop.permute.xlu0 %811
      %813 = vrot.lane.b32.xlu0 %v795, 91
      %v814 = vpop.permute.xlu0 %813
      %815 = vrot.lane.b32.xlu0 %v796, 91
      %v816 = vpop.permute.xlu0 %815
      %817 = vrot.lane.b32.xlu0 %v797, 91
      %v818 = vpop.permute.xlu0 %817
      %819 = vrot.lane.b32.xlu0 %v798, 91
      %v820 = vpop.permute.xlu0 %819
      %821 = vrot.lane.b32.xlu0 %v799, 91
      %v822 = vpop.permute.xlu0 %821
      %823 = vrot.lane.b32.xlu0 %v800, 91
      %v824 = vpop.permute.xlu0 %823
      %vm825 = vcmask 744448
      %v826 = vsel %vm825, %v810, %v812
      %v827 = vsel %vm825, %v812, %v814
      %v828 = vsel %vm825, %v814, %v816
      %v829 = vsel %vm825, %v818, %v820
      %v830 = vsel %vm825, %v820, %v822
      %v831 = vsel %vm825, %v822, %v824
      %v840 = vadd.f32 %v777, %v810
      %v841 = vadd.f32 %v778, %v826
      %v842 = vadd.f32 %v779, %v827
      %v843 = vadd.f32 %v780, %v828
      %v844 = vadd.f32 %v781, %v818
      %v845 = vadd.f32 %v782, %v829
      %v846 = vadd.f32 %v783, %v830
      %v847 = vadd.f32 %v784, %v831
      %848 = vset.pattern.permute.xlu0 8
      %849 = vperm.xlu0 %848, %v321
      %v850 = vpop.permute.xlu0 %849
      %852 = vset.pattern.permute.xlu0 8
      %853 = vperm.xlu0 %852, %v322
      %v854 = vpop.permute.xlu0 %853
      %v856 = vmul.f32 %v850, %v650
      %v857 = vmul.f32 %v850, %v654
      %v858 = vmul.f32 %v850, %v658
      %v859 = vmul.f32 %v850, %v662
      %v860 = vmul.f32 %v854, %v650
      %v861 = vmul.f32 %v854, %v654
      %v862 = vmul.f32 %v854, %v658
      %v863 = vmul.f32 %v854, %v662
      %872 = vrot.lane.b32.xlu0 %v856, 90
      %v873 = vpop.permute.xlu0 %872
      %874 = vrot.lane.b32.xlu0 %v857, 90
      %v875 = vpop.permute.xlu0 %874
      %876 = vrot.lane.b32.xlu0 %v858, 90
      %v877 = vpop.permute.xlu0 %876
      %878 = vrot.lane.b32.xlu0 %v859, 90
      %v879 = vpop.permute.xlu0 %878
      %880 = vrot.lane.b32.xlu0 %v860, 90
      %v881 = vpop.permute.xlu0 %880
      %882 = vrot.lane.b32.xlu0 %v861, 90
      %v883 = vpop.permute.xlu0 %882
      %884 = vrot.lane.b32.xlu0 %v862, 90
      %v885 = vpop.permute.xlu0 %884
      %886 = vrot.lane.b32.xlu0 %v863, 90
      %v887 = vpop.permute.xlu0 %886
      %vm888 = vcmask 736256
      %v889 = vsel %vm888, %v873, %v875
      %v890 = vsel %vm888, %v875, %v877
      %v891 = vsel %vm888, %v877, %v879
      %v892 = vsel %vm888, %v881, %v883
      %v893 = vsel %vm888, %v883, %v885
      %v894 = vsel %vm888, %v885, %v887
      %v903 = vadd.f32 %v840, %v873
      %v904 = vadd.f32 %v841, %v889
      %v905 = vadd.f32 %v842, %v890
      %v906 = vadd.f32 %v843, %v891
      %v907 = vadd.f32 %v844, %v881
      %v908 = vadd.f32 %v845, %v892
      %v909 = vadd.f32 %v846, %v893
      %v910 = vadd.f32 %v847, %v894
      %912 = vset.pattern.permute.xlu0 0
      %913 = vperm.xlu0 %912, %v323
      %v914 = vpop.permute.xlu0 %913
      %917 = vset.pattern.permute.xlu0 0
      %918 = vperm.xlu0 %917, %v324
      %v919 = vpop.permute.xlu0 %918
      %v921 = vadd.f32 %v903, %v914
      %v922 = vadd.f32 %v904, %v914
      %v923 = vadd.f32 %v905, %v914
      %v924 = vadd.f32 %v906, %v914
      %v925 = vadd.f32 %v907, %v919
      %v926 = vadd.f32 %v908, %v919
      %v927 = vadd.f32 %v909, %v919
      %v928 = vadd.f32 %v910, %v919
      %v929 = vmax.f32 %v921, 0.0
      %v930 = vmax.f32 %v922, 0.0
      %v931 = vmax.f32 %v923, 0.0
      %v932 = vmax.f32 %v924, 0.0
      %v933 = vmax.f32 %v925, 0.0
      %v934 = vmax.f32 %v926, 0.0
      %v935 = vmax.f32 %v927, 0.0
      %v936 = vmax.f32 %v928, 0.0
      %937 = vrot.lane.b32.xlu0 %v309, 109
      %v938 = vpop.permute.xlu0 %937
      %939 = vrot.lane.b32.xlu0 %v313, 109
      %v940 = vpop.permute.xlu0 %939
      %941 = vrot.lane.b32.xlu0 %v317, 109
      %v942 = vpop.permute.xlu0 %941
      %v943 = vsel %vm616, %v938, %v940
      %v944 = vsel %vm616, %v940, %v942
      %v949 = vmul.f32 %v929, %v938
      %v950 = vmul.f32 %v930, %v943
      %v951 = vmul.f32 %v931, %v944
      %v952 = vmul.f32 %v932, %v942
      %v953 = vmul.f32 %v933, %v938
      %v954 = vmul.f32 %v934, %v943
      %v955 = vmul.f32 %v935, %v944
      %v956 = vmul.f32 %v936, %v942
      %v957 = vpack.c.bf16 %v953, %v949
      %v958 = vpack.c.bf16 %v954, %v950
      %v959 = vpack.c.bf16 %v955, %v951
      %v960 = vpack.c.bf16 %v956, %v952
      %965 = vrot.lane.b32.xlu0 %v957, 19
      %v966 = vpop.permute.xlu0 %965
      %967 = vrot.lane.b32.xlu0 %v958, 19
      %v968 = vpop.permute.xlu0 %967
      %969 = vrot.lane.b32.xlu0 %v959, 19
      %v970 = vpop.permute.xlu0 %969
      %971 = vrot.lane.b32.xlu0 %v960, 19
      %v972 = vpop.permute.xlu0 %971
      %vm973 = vcmask 154624
      %v974 = vsel %vm973, %v966, %v968
      %v975 = vsel %vm973, %v968, %v970
      %v976 = vsel %vm973, %v970, %v972
      %980 = vst [vmem:[#allocation2 + $0x8] sm:$0xff] %v974
      %981 = vst [vmem:[#allocation2 + $0x10] sm:$0xff] %v975
      %982 = vst [vmem:[#allocation2 + $0x18] sm:$0xff] %v976
      %v983 = vld [vmem:[#allocation2] sm:$0xff]
      %v984 = vld [vmem:[#allocation2 + $0x8] sm:$0xff]
      %v985 = vld [vmem:[#allocation2 + $0x10] sm:$0xff]
      %v986 = vld [vmem:[#allocation2 + $0x18] sm:$0xff]
      %991 = vrot.lane.b32.xlu0 %v983, 19
      %v992 = vpop.permute.xlu0 %991
      %993 = vrot.lane.b32.xlu0 %v984, 19
      %v994 = vpop.permute.xlu0 %993
      %995 = vrot.lane.b32.xlu0 %v985, 19
      %v996 = vpop.permute.xlu0 %995
      %997 = vrot.lane.b32.xlu0 %v986, 19
      %v998 = vpop.permute.xlu0 %997
      %v999 = vsel %vm973, %v992, %v994
      %v1000 = vsel %vm973, %v994, %v996
      %v1001 = vsel %vm973, %v996, %v998
      %1005 = vst [vmem:[#allocation3] sm:$0xff] %v999
      %1006 = vst [vmem:[#allocation3 + $0x8] sm:$0xff] %v1000
      %1007 = vst [vmem:[#allocation3 + $0x10] sm:$0xff] %v1001
      %v1008 = vld [vmem:[#allocation2] sm:$0xff]
      %v1009 = vld [vmem:[#allocation2 + $0x8] sm:$0xff]
      %v1010 = vld [vmem:[#allocation2 + $0x10] sm:$0xff]
      %v1011 = vld [vmem:[#allocation2 + $0x18] sm:$0xff]
      %1016 = vrot.lane.b32.xlu0 %v1008, 18
      %v1017 = vpop.permute.xlu0 %1016
      %1018 = vrot.lane.b32.xlu0 %v1009, 18
      %v1019 = vpop.permute.xlu0 %1018
      %1020 = vrot.lane.b32.xlu0 %v1010, 18
      %v1021 = vpop.permute.xlu0 %1020
      %1022 = vrot.lane.b32.xlu0 %v1011, 18
      %v1023 = vpop.permute.xlu0 %1022
      %vm1024 = vcmask 146432
      %v1025 = vsel %vm1024, %v1017, %v1019
      %v1026 = vsel %vm1024, %v1019, %v1021
      %v1027 = vsel %vm1024, %v1021, %v1023
      %1031 = vst [vmem:[#allocation3 + $0x18] sm:$0xff] %v1025
      %1032 = vst [vmem:[#allocation3 + $0x20] sm:$0xff] %v1026
      %1033 = vst [vmem:[#allocation3 + $0x28] sm:$0xff] %v1027
      %v1034 = vld [vmem:[#allocation2] sm:$0xff]
      %v1035 = vld [vmem:[#allocation2 + $0x8] sm:$0xff]
      %v1036 = vld [vmem:[#allocation2 + $0x10] sm:$0xff]
      %v1037 = vld [vmem:[#allocation2 + $0x18] sm:$0xff]
      %1042 = vrot.lane.b32.xlu0 %v1034, 17
      %v1043 = vpop.permute.xlu0 %1042
      %1044 = vrot.lane.b32.xlu0 %v1035, 17
      %v1045 = vpop.permute.xlu0 %1044
      %1046 = vrot.lane.b32.xlu0 %v1036, 17
      %v1047 = vpop.permute.xlu0 %1046
      %1048 = vrot.lane.b32.xlu0 %v1037, 17
      %v1049 = vpop.permute.xlu0 %1048
      %vm1050 = vcmask 138240
      %v1051 = vsel %vm1050, %v1043, %v1045
      %v1052 = vsel %vm1050, %v1045, %v1047
      %v1053 = vsel %vm1050, %v1047, %v1049
      %1057 = vst [vmem:[#allocation3 + $0x30] sm:$0xff] %v1051
      %1058 = vst [vmem:[#allocation3 + $0x38] sm:$0xff] %v1052
      %1059 = vst [vmem:[#allocation3 + $0x40] sm:$0xff] %v1053
      %v1060 = vld [vmem:[#allocation2] sm:$0xff]
      %v1061 = vld [vmem:[#allocation2 + $0x8] sm:$0xff]
      %v1062 = vld [vmem:[#allocation2 + $0x10] sm:$0xff]
      %v1063 = vld [vmem:[#allocation2 + $0x18] sm:$0xff]
      %1068 = vrot.lane.b32.xlu0 %v1060, 1
      %v1069 = vpop.permute.xlu0 %1068
      %1070 = vrot.lane.b32.xlu0 %v1061, 1
      %v1071 = vpop.permute.xlu0 %1070
      %1072 = vrot.lane.b32.xlu0 %v1062, 1
      %v1073 = vpop.permute.xlu0 %1072
      %1074 = vrot.lane.b32.xlu0 %v1063, 1
      %v1075 = vpop.permute.xlu0 %1074
      %vm1076 = vcmask 7168
      %v1077 = vsel %vm1076, %v1069, %v1071
      %v1078 = vsel %vm1076, %v1071, %v1073
      %v1079 = vsel %vm1076, %v1073, %v1075
      %1083 = vst [vmem:[#allocation3 + $0x48] sm:$0xff] %v1077
      %1084 = vst [vmem:[#allocation3 + $0x50] sm:$0xff] %v1078
      %1085 = vst [vmem:[#allocation3 + $0x58] sm:$0xff] %v1079
      %v1086 = vld [vmem:[#allocation2 + $0x8] sm:$0xff]
      %v1087 = vld [vmem:[#allocation2 + $0x10] sm:$0xff]
      %v1088 = vld [vmem:[#allocation2 + $0x18] sm:$0xff]
      %1089 = vst [vmem:[#allocation3 + $0x60] sm:$0xff] %v1086
      %1090 = vst [vmem:[#allocation3 + $0x68] sm:$0xff] %v1087
      %1091 = vst [vmem:[#allocation3 + $0x70] sm:$0xff] %v1088
      %v1092 = vld [vmem:[#allocation2 + $0x8] sm:$0xff]
      %v1093 = vld [vmem:[#allocation2 + $0x10] sm:$0xff]
      %v1094 = vld [vmem:[#allocation2 + $0x18] sm:$0xff]
      %v1095 = vld [vmem:[#allocation2 + $0x20] sm:$0xff]
      %1100 = vrot.lane.b32.xlu0 %v1092, 127
      %v1101 = vpop.permute.xlu0 %1100
      %1102 = vrot.lane.b32.xlu0 %v1093, 127
      %v1103 = vpop.permute.xlu0 %1102
      %1104 = vrot.lane.b32.xlu0 %v1094, 127
      %v1105 = vpop.permute.xlu0 %1104
      %1106 = vrot.lane.b32.xlu0 %v1095, 127
      %v1107 = vpop.permute.xlu0 %1106
      %vm1108 = vcmask 1039360
      %v1109 = vsel %vm1108, %v1101, %v1103
      %v1110 = vsel %vm1108, %v1103, %v1105
      %v1111 = vsel %vm1108, %v1105, %v1107
      %1115 = vst [vmem:[#allocation3 + $0x78] sm:$0xff] %v1109
      %1116 = vst [vmem:[#allocation3 + $0x80] sm:$0xff] %v1110
      %1117 = vst [vmem:[#allocation3 + $0x88] sm:$0xff] %v1111
      %v1118 = vld [vmem:[#allocation2 + $0x8] sm:$0xff]
      %v1119 = vld [vmem:[#allocation2 + $0x10] sm:$0xff]
      %v1120 = vld [vmem:[#allocation2 + $0x18] sm:$0xff]
      %v1121 = vld [vmem:[#allocation2 + $0x20] sm:$0xff]
      %1126 = vrot.lane.b32.xlu0 %v1118, 111
      %v1127 = vpop.permute.xlu0 %1126
      %1128 = vrot.lane.b32.xlu0 %v1119, 111
      %v1129 = vpop.permute.xlu0 %1128
      %1130 = vrot.lane.b32.xlu0 %v1120, 111
      %v1131 = vpop.permute.xlu0 %1130
      %1132 = vrot.lane.b32.xlu0 %v1121, 111
      %v1133 = vpop.permute.xlu0 %1132
      %vm1134 = vcmask 908288
      %v1135 = vsel %vm1134, %v1127, %v1129
      %v1136 = vsel %vm1134, %v1129, %v1131
      %v1137 = vsel %vm1134, %v1131, %v1133
      %1141 = vst [vmem:[#allocation3 + $0x90] sm:$0xff] %v1135
      %1142 = vst [vmem:[#allocation3 + $0x98] sm:$0xff] %v1136
      %1143 = vst [vmem:[#allocation3 + $0xa0] sm:$0xff] %v1137
      %v1144 = vld [vmem:[#allocation2 + $0x8] sm:$0xff]
      %v1145 = vld [vmem:[#allocation2 + $0x10] sm:$0xff]
      %v1146 = vld [vmem:[#allocation2 + $0x18] sm:$0xff]
      %v1147 = vld [vmem:[#allocation2 + $0x20] sm:$0xff]
      %1152 = vrot.lane.b32.xlu0 %v1144, 110
      %v1153 = vpop.permute.xlu0 %1152
      %1154 = vrot.lane.b32.xlu0 %v1145, 110
      %v1155 = vpop.permute.xlu0 %1154
      %1156 = vrot.lane.b32.xlu0 %v1146, 110
      %v1157 = vpop.permute.xlu0 %1156
      %1158 = vrot.lane.b32.xlu0 %v1147, 110
      %v1159 = vpop.permute.xlu0 %1158
      %vm1160 = vcmask 900096
      %v1161 = vsel %vm1160, %v1153, %v1155
      %v1162 = vsel %vm1160, %v1155, %v1157
      %v1163 = vsel %vm1160, %v1157, %v1159
      %1167 = vst [vmem:[#allocation3 + $0xa8] sm:$0xff] %v1161
      %1168 = vst [vmem:[#allocation3 + $0xb0] sm:$0xff] %v1162
      %1169 = vst [vmem:[#allocation3 + $0xb8] sm:$0xff] %v1163
      %v1170 = vld [vmem:[#allocation2 + $0x8] sm:$0xff]
      %v1171 = vld [vmem:[#allocation2 + $0x10] sm:$0xff]
      %v1172 = vld [vmem:[#allocation2 + $0x18] sm:$0xff]
      %v1173 = vld [vmem:[#allocation2 + $0x20] sm:$0xff]
      %1178 = vrot.lane.b32.xlu0 %v1170, 109
      %v1179 = vpop.permute.xlu0 %1178
      %1180 = vrot.lane.b32.xlu0 %v1171, 109
      %v1181 = vpop.permute.xlu0 %1180
      %1182 = vrot.lane.b32.xlu0 %v1172, 109
      %v1183 = vpop.permute.xlu0 %1182
      %1184 = vrot.lane.b32.xlu0 %v1173, 109
      %v1185 = vpop.permute.xlu0 %1184
      %vm1186 = vcmask 891904
      %v1187 = vsel %vm1186, %v1179, %v1181
      %v1188 = vsel %vm1186, %v1181, %v1183
      %v1189 = vsel %vm1186, %v1183, %v1185
      %1193 = vst [vmem:[#allocation3 + $0xc0] sm:$0xff] %v1187
      %1194 = vst [vmem:[#allocation3 + $0xc8] sm:$0xff] %v1188
      %1195 = vst [vmem:[#allocation3 + $0xd0] sm:$0xff] %v1189
      %v1196 = vld [vmem:[%s4] sm:$0xff]
      %v1197 = vld [vmem:[%s4 + $0x8] sm:$0xff]
      %v1198 = vld [vmem:[#allocation3] sm:$0xff]
      %v1199 = vld [vmem:[#allocation3 + $0x8] sm:$0xff]
      %v1200 = vld [vmem:[#allocation3 + $0x10] sm:$0xff]
      %v1201 = vld [vmem:[#allocation3 + $0x18] sm:$0xff]
      %v1202 = vld [vmem:[#allocation3 + $0x20] sm:$0xff]
      %v1203 = vld [vmem:[#allocation3 + $0x28] sm:$0xff]
      %v1204 = vld [vmem:[#allocation3 + $0x30] sm:$0xff]
      %v1205 = vld [vmem:[#allocation3 + $0x38] sm:$0xff]
      %v1206 = vld [vmem:[#allocation3 + $0x40] sm:$0xff]
      %v1207 = vld [vmem:[#allocation3 + $0x48] sm:$0xff]
      %v1208 = vld [vmem:[#allocation3 + $0x50] sm:$0xff]
      %v1209 = vld [vmem:[#allocation3 + $0x58] sm:$0xff]
      %v1210 = vld [vmem:[#allocation3 + $0x60] sm:$0xff]
      %v1211 = vld [vmem:[#allocation3 + $0x68] sm:$0xff]
      %v1212 = vld [vmem:[#allocation3 + $0x70] sm:$0xff]
      %v1213 = vld [vmem:[#allocation3 + $0x78] sm:$0xff]
      %v1214 = vld [vmem:[#allocation3 + $0x80] sm:$0xff]
      %v1215 = vld [vmem:[#allocation3 + $0x88] sm:$0xff]
      %v1216 = vld [vmem:[#allocation3 + $0x90] sm:$0xff]
      %v1217 = vld [vmem:[#allocation3 + $0x98] sm:$0xff]
      %v1218 = vld [vmem:[#allocation3 + $0xa0] sm:$0xff]
      %v1219 = vld [vmem:[#allocation3 + $0xa8] sm:$0xff]
      %v1220 = vld [vmem:[#allocation3 + $0xb0] sm:$0xff]
      %v1221 = vld [vmem:[#allocation3 + $0xb8] sm:$0xff]
      %v1222 = vld [vmem:[#allocation3 + $0xc0] sm:$0xff]
      %v1223 = vld [vmem:[#allocation3 + $0xc8] sm:$0xff]
      %v1224 = vld [vmem:[#allocation3 + $0xd0] sm:$0xff]
      %1226 = vset.pattern.permute.xlu0 0
      %1227 = vperm.xlu0 %1226, %v325
      %v1228 = vpop.permute.xlu0 %1227
      %1231 = vset.pattern.permute.xlu0 0
      %1232 = vperm.xlu0 %1231, %v326
      %v1233 = vpop.permute.xlu0 %1232
      %v1237 = vunpack.c.l.b16 %v1196
      %v1238 = vunpack.c.h.b16 %v1196
      %v1239 = vunpack.c.l.b16 %v1197
      %v1240 = vunpack.c.h.b16 %v1197
      %v1241 = vpack.c.b16 %v1239, %v1237
      %v1242 = vpack.c.b16 %v1240, %v1238
      %vm1244 = vcmask 130048
      %v1246 = vsel %vm1244, %v1242, 0
      %1248 = vmatprep.subr.bf16.mxu0 %v1199
      %1249 = vmatpush1.bf16.msra.mxu0 %v1198
      %1250 = vmatprep.subr.bf16.mxu0 %v1202
      %1251 = vmatpush1.bf16.msra.mxu0 %v1201
      %1252 = vmatprep.subr.bf16.mxu0 %v1205
      %1253 = vmatpush1.bf16.msra.mxu0 %v1204
      %1254 = vmatprep.subr.bf16.mxu0 %v1208
      %1255 = vmatpush1.bf16.msra.mxu0 %v1207
      %1256 = vmatprep.subr.bf16.mxu0 %v1211
      %1257 = vmatpush1.bf16.msra.mxu0 %v1210
      %1258 = vmatprep.subr.bf16.mxu0 %v1214
      %1259 = vmatpush1.bf16.msra.mxu0 %v1213
      %1260 = vmatprep.subr.bf16.mxu0 %v1217
      %1261 = vmatpush1.bf16.msra.mxu0 %v1216
      %1262 = vmatprep.subr.bf16.mxu0 %v1220
      %1263 = vmatpush1.bf16.msra.mxu0 %v1219
      %1264 = vmatprep.subr.bf16.mxu0 %v1223
      %1265 = vmatpush1.bf16.msra.mxu0 %v1222
      %1266 = vmatprep.subr.bf16.mxu0 0
      %1267 = vmatpush1.bf16.msra.mxu0 0
      %1268 = vmatprep.subr.bf16.mxu0 0
      %1269 = vmatpush1.bf16.msra.mxu0 0
      %1270 = vmatprep.subr.bf16.mxu0 0
      %1271 = vmatpush1.bf16.msra.mxu0 0
      %1272 = vmatprep.subr.bf16.mxu0 0
      %1273 = vmatpush1.bf16.msra.mxu0 0
      %1274 = vmatprep.subr.bf16.mxu0 0
      %1275 = vmatpush1.bf16.msra.mxu0 0
      %1276 = vmatprep.subr.bf16.mxu0 0
      %1277 = vmatpush1.bf16.msra.mxu0 0
      %1278 = vmatprep.subr.bf16.mxu0 0
      %1279 = vmatpush1.bf16.msra.mxu0 0
      %1280 = vmatprep.mubr.bf16.mxu0 %v1246
      %1281 = vmatmul.mubr.bf16.gmra.mrb[0].mxu0 %v1241
      %v1282 = vpop.f32.mrb[0].mxu0
      %v1283 = vadd.f32 %v1228, %v1282
      %v1284 = vpop.f32.mrb[0].mxu0
      %v1285 = vadd.f32 %v1228, %v1284
      %v1286 = vpop.f32.mrb[0].mxu0
      %v1287 = vadd.f32 %v1233, %v1286
      %v1288 = vpop.f32.mrb[0].mxu0
      %v1289 = vadd.f32 %v1233, %v1288
      %1290 = vdwg.mxu0
      %1291 = vmatprep.subr.bf16.mxu0 0
      %1292 = vmatpush1.bf16.msra.mxu0 %v1200
      %1293 = vmatprep.subr.bf16.mxu0 0
      %1294 = vmatpush1.bf16.msra.mxu0 %v1203
      %1295 = vmatprep.subr.bf16.mxu0 0
      %1296 = vmatpush1.bf16.msra.mxu0 %v1206
      %1297 = vmatprep.subr.bf16.mxu0 0
      %1298 = vmatpush1.bf16.msra.mxu0 %v1209
      %1299 = vmatprep.subr.bf16.mxu0 0
      %1300 = vmatpush1.bf16.msra.mxu0 %v1212
      %1301 = vmatprep.subr.bf16.mxu0 0
      %1302 = vmatpush1.bf16.msra.mxu0 %v1215
      %1303 = vmatprep.subr.bf16.mxu0 0
      %1304 = vmatpush1.bf16.msra.mxu0 %v1218
      %1305 = vmatprep.subr.bf16.mxu0 0
      %1306 = vmatpush1.bf16.msra.mxu0 %v1221
      %1307 = vmatprep.subr.bf16.mxu0 0
      %1308 = vmatpush1.bf16.msra.mxu0 %v1224
      %1309 = vmatprep.subr.bf16.mxu0 0
      %1310 = vmatpush1.bf16.msra.mxu0 0
      %1311 = vmatprep.subr.bf16.mxu0 0
      %1312 = vmatpush1.bf16.msra.mxu0 0
      %1313 = vmatprep.subr.bf16.mxu0 0
      %1314 = vmatpush1.bf16.msra.mxu0 0
      %1315 = vmatprep.subr.bf16.mxu0 0
      %1316 = vmatpush1.bf16.msra.mxu0 0
      %1317 = vmatprep.subr.bf16.mxu0 0
      %1318 = vmatpush1.bf16.msra.mxu0 0
      %1319 = vmatprep.subr.bf16.mxu0 0
      %1320 = vmatpush1.bf16.msra.mxu0 0
      %1321 = vmatprep.subr.bf16.mxu0 0
      %1322 = vmatpush1.bf16.msra.mxu0 0
      %1323 = vmatprep.mubr.bf16.mxu0 %v1246
      %1324 = vmatmul.mubr.bf16.gmra.mrb[0].mxu0 %v1241
      %v1325 = vpop.f32.mrb[0].mxu0
      %v1326 = vadd.f32 %v1228, %v1325
      %v1327 = vpop.f32.mrb[0].mxu0
      %v1328 = vpop.f32.mrb[0].mxu0
      %v1329 = vadd.f32 %v1233, %v1328
      %v1330 = vpop.f32.mrb[0].mxu0
      %1331 = vdwg.mxu0
      %v1332 = vmax.f32 %v1283, 0.0
      %v1333 = vmax.f32 %v1285, 0.0
      %v1334 = vmax.f32 %v1326, 0.0
      %v1335 = vmax.f32 %v1287, 0.0
      %v1336 = vmax.f32 %v1289, 0.0
      %v1337 = vmax.f32 %v1329, 0.0
      %v1338 = vmul.f32 %v1332, %v309
      %v1339 = vmul.f32 %v1333, %v313
      %v1340 = vmul.f32 %v1334, %v317
      %v1341 = vmul.f32 %v1335, %v309
      %v1342 = vmul.f32 %v1336, %v313
      %v1343 = vmul.f32 %v1337, %v317
      %v1344 = vpack.c.bf16 %v1341, %v1338
      %v1345 = vpack.c.bf16 %v1342, %v1339
      %v1346 = vpack.c.bf16 %v1343, %v1340
      %1347 = vst [vmem:[#allocation2 + $0x8] sm:$0xff] %v1344
      %1348 = vst [vmem:[#allocation2 + $0x10] sm:$0xff] %v1345
      %1349 = vst [vmem:[#allocation2 + $0x18] sm:$0xff] %v1346
      %v1350 = vld [vmem:[%s6] sm:$0xf]
      %v1351 = vld [vmem:[%s6 + $0x4] sm:$0x1]
      %v1352 = vld [vmem:[#allocation2] sm:$0xff]
      %v1353 = vld [vmem:[#allocation2 + $0x8] sm:$0xff]
      %v1354 = vld [vmem:[#allocation2 + $0x10] sm:$0xff]
      %v1355 = vld [vmem:[#allocation2 + $0x18] sm:$0xff]
      %v1356 = vld [vmem:[#allocation2 + $0x20] sm:$0xff]
      %v1359 = vunpack.c.l.b16 %v1350
      %v1360 = vunpack.c.l.b16 %v1351
      %v1361 = vpack.c.b16 %v1360, %v1359
      %v1363 = vsel %vm1244, %v1361, 0
      %1365 = vmatprep.subr.bf16.mxu0 %v1353
      %1366 = vmatpush1.bf16.msra.mxu0 %v1352
      %1367 = vmatprep.subr.bf16.mxu0 0
      %1368 = vmatpush1.bf16.msra.mxu0 0
      %1369 = vmatprep.subr.bf16.mxu0 0
      %1370 = vmatpush1.bf16.msra.mxu0 0
      %1371 = vmatprep.subr.bf16.mxu0 0
      %1372 = vmatpush1.bf16.msra.mxu0 0
      %1373 = vmatprep.subr.bf16.mxu0 0
      %1374 = vmatpush1.bf16.msra.mxu0 0
      %1375 = vmatprep.subr.bf16.mxu0 0
      %1376 = vmatpush1.bf16.msra.mxu0 0
      %1377 = vmatprep.subr.bf16.mxu0 0
      %1378 = vmatpush1.bf16.msra.mxu0 0
      %1379 = vmatprep.subr.bf16.mxu0 0
      %1380 = vmatpush1.bf16.msra.mxu0 0
      %1381 = vmatprep.subr.bf16.mxu0 0
      %1382 = vmatpush1.bf16.msra.mxu0 0
      %1383 = vmatprep.subr.bf16.mxu0 0
      %1384 = vmatpush1.bf16.msra.mxu0 0
      %1385 = vmatprep.subr.bf16.mxu0 0
      %1386 = vmatpush1.bf16.msra.mxu0 0
      %1387 = vmatprep.subr.bf16.mxu0 0
      %1388 = vmatpush1.bf16.msra.mxu0 0
      %1389 = vmatprep.subr.bf16.mxu0 0
      %1390 = vmatpush1.bf16.msra.mxu0 0
      %1391 = vmatprep.subr.bf16.mxu0 0
      %1392 = vmatpush1.bf16.msra.mxu0 0
      %1393 = vmatprep.subr.bf16.mxu0 0
      %1394 = vmatpush1.bf16.msra.mxu0 0
      %1395 = vmatprep.subr.bf16.mxu0 0
      %1396 = vmatpush1.bf16.msra.mxu0 0
      %1397 = vmatprep.mubr.bf16.mxu0 0
      %1398 = vmatmul.mubr.bf16.gmra.mrb[0].mxu0 %v1363
      %v1399 = vpop.f32.mrb[0].mxu0
      %v1400 = vadd.f32 0.0, %v1399
      %v1401 = vpop.f32.mrb[0].mxu0
      %v1402 = vadd.f32 0.0, %v1401
      %v1403 = vpop.f32.mrb[0].mxu0
      %v1404 = vpop.f32.mrb[0].mxu0
      %v1405 = vadd.f32 0.0, %v1404
      %1406 = vdwg.mxu0
      %1407 = vmatprep.subr.bf16.mxu0 %v1355
      %1408 = vmatpush1.bf16.msra.mxu0 %v1354
      %1409 = vmatprep.subr.bf16.mxu0 0
      %1410 = vmatpush1.bf16.msra.mxu0 0
      %1411 = vmatprep.subr.bf16.mxu0 0
      %1412 = vmatpush1.bf16.msra.mxu0 0
      %1413 = vmatprep.subr.bf16.mxu0 0
      %1414 = vmatpush1.bf16.msra.mxu0 0
      %1415 = vmatprep.subr.bf16.mxu0 0
      %1416 = vmatpush1.bf16.msra.mxu0 0
      %1417 = vmatprep.subr.bf16.mxu0 0
      %1418 = vmatpush1.bf16.msra.mxu0 0
      %1419 = vmatprep.subr.bf16.mxu0 0
      %1420 = vmatpush1.bf16.msra.mxu0 0
      %1421 = vmatprep.subr.bf16.mxu0 0
      %1422 = vmatpush1.bf16.msra.mxu0 0
      %1423 = vmatprep.subr.bf16.mxu0 0
      %1424 = vmatpush1.bf16.msra.mxu0 0
      %1425 = vmatprep.subr.bf16.mxu0 0
      %1426 = vmatpush1.bf16.msra.mxu0 0
      %1427 = vmatprep.subr.bf16.mxu0 0
      %1428 = vmatpush1.bf16.msra.mxu0 0
      %1429 = vmatprep.subr.bf16.mxu0 0
      %1430 = vmatpush1.bf16.msra.mxu0 0
      %1431 = vmatprep.subr.bf16.mxu0 0
      %1432 = vmatpush1.bf16.msra.mxu0 0
      %1433 = vmatprep.subr.bf16.mxu0 0
      %1434 = vmatpush1.bf16.msra.mxu0 0
      %1435 = vmatprep.subr.bf16.mxu0 0
      %1436 = vmatpush1.bf16.msra.mxu0 0
      %1437 = vmatprep.subr.bf16.mxu0 0
      %1438 = vmatpush1.bf16.msra.mxu0 0
      %1439 = vmatprep.mubr.bf16.mxu0 0
      %1440 = vmatmul.mubr.bf16.gmra.mrb[0].mxu0 %v1363
      %v1441 = vpop.f32.mrb[0].mxu0
      %v1442 = vadd.f32 0.0, %v1441
      %v1443 = vpop.f32.mrb[0].mxu0
      %v1444 = vadd.f32 0.0, %v1443
      %v1445 = vpop.f32.mrb[0].mxu0
      %v1446 = vadd.f32 0.0, %v1445
      %v1447 = vpop.f32.mrb[0].mxu0
      %v1448 = vadd.f32 0.0, %v1447
      %1449 = vdwg.mxu0
      %1450 = vmatprep.subr.bf16.mxu0 0
      %1451 = vmatpush1.bf16.msra.mxu0 %v1356
      %1452 = vmatprep.subr.bf16.mxu0 0
      %1453 = vmatpush1.bf16.msra.mxu0 0
      %1454 = vmatprep.subr.bf16.mxu0 0
      %1455 = vmatpush1.bf16.msra.mxu0 0
      %1456 = vmatprep.subr.bf16.mxu0 0
      %1457 = vmatpush1.bf16.msra.mxu0 0
      %1458 = vmatprep.subr.bf16.mxu0 0
      %1459 = vmatpush1.bf16.msra.mxu0 0
      %1460 = vmatprep.subr.bf16.mxu0 0
      %1461 = vmatpush1.bf16.msra.mxu0 0
      %1462 = vmatprep.subr.bf16.mxu0 0
      %1463 = vmatpush1.bf16.msra.mxu0 0
      %1464 = vmatprep.subr.bf16.mxu0 0
      %1465 = vmatpush1.bf16.msra.mxu0 0
      %1466 = vmatprep.subr.bf16.mxu0 0
      %1467 = vmatpush1.bf16.msra.mxu0 0
      %1468 = vmatprep.subr.bf16.mxu0 0
      %1469 = vmatpush1.bf16.msra.mxu0 0
      %1470 = vmatprep.subr.bf16.mxu0 0
      %1471 = vmatpush1.bf16.msra.mxu0 0
      %1472 = vmatprep.subr.bf16.mxu0 0
      %1473 = vmatpush1.bf16.msra.mxu0 0
      %1474 = vmatprep.subr.bf16.mxu0 0
      %1475 = vmatpush1.bf16.msra.mxu0 0
      %1476 = vmatprep.subr.bf16.mxu0 0
      %1477 = vmatpush1.bf16.msra.mxu0 0
      %1478 = vmatprep.subr.bf16.mxu0 0
      %1479 = vmatpush1.bf16.msra.mxu0 0
      %1480 = vmatprep.subr.bf16.mxu0 0
      %1481 = vmatpush1.bf16.msra.mxu0 0
      %1482 = vmatprep.mubr.bf16.mxu0 0
      %1483 = vmatmul.mubr.bf16.gmra.mrb[0].mxu0 %v1363
      %v1484 = vpop.f32.mrb[0].mxu0
      %v1485 = vadd.f32 0.0, %v1484
      %v1486 = vpop.f32.mrb[0].mxu0
      %v1487 = vpop.f32.mrb[0].mxu0
      %v1488 = vadd.f32 0.0, %v1487
      %v1489 = vpop.f32.mrb[0].mxu0
      %1490 = vdwg.mxu0
      %v1491 = vadd.f32 %v1400, 0.0
      %v1492 = vadd.f32 %v1402, 0.0
      %v1493 = vadd.f32 %v1442, 0.0
      %v1494 = vadd.f32 %v1444, 0.0
      %v1499 = vrot.slane %v1400, 1
      %v1500 = vrot.slane %v1402, 1
      %v1501 = vrot.slane %v1442, 1
      %v1502 = vrot.slane %v1444, 1
      %1503 = vrot.lane.b32.xlu0 %v1499, 127
      %v1504 = vpop.permute.xlu0 %1503
      %1505 = vrot.lane.b32.xlu0 %v1500, 127
      %v1506 = vpop.permute.xlu0 %1505
      %1507 = vrot.lane.b32.xlu0 %v1501, 127
      %v1508 = vpop.permute.xlu0 %1507
      %1509 = vrot.lane.b32.xlu0 %v1502, 127
      %v1510 = vpop.permute.xlu0 %1509
      %v1511 = vsel %vm418, %v1504, %v1506
      %v1512 = vsel %vm418, %v1506, %v1508
      %v1513 = vsel %vm418, %v1508, %v1510
      %v1518 = vadd.f32 %v1491, %v1511
      %v1519 = vadd.f32 %v1492, %v1512
      %v1520 = vadd.f32 %v1493, %v1513
      %v1521 = vadd.f32 %v1494, %v1510
      %v1522 = vrot.slane %v1400, 2
      %v1523 = vrot.slane %v1402, 2
      %v1524 = vrot.slane %v1442, 2
      %v1525 = vrot.slane %v1444, 2
      %1526 = vrot.lane.b32.xlu0 %v1522, 126
      %v1527 = vpop.permute.xlu0 %1526
      %1528 = vrot.lane.b32.xlu0 %v1523, 126
      %v1529 = vpop.permute.xlu0 %1528
      %1530 = vrot.lane.b32.xlu0 %v1524, 126
      %v1531 = vpop.permute.xlu0 %1530
      %1532 = vrot.lane.b32.xlu0 %v1525, 126
      %v1533 = vpop.permute.xlu0 %1532
      %v1534 = vsel %vm481, %v1527, %v1529
      %v1535 = vsel %vm481, %v1529, %v1531
      %v1536 = vsel %vm481, %v1531, %v1533
      %v1541 = vadd.f32 %v1518, %v1534
      %v1542 = vadd.f32 %v1519, %v1535
      %v1543 = vadd.f32 %v1520, %v1536
      %v1544 = vadd.f32 %v1521, %v1533
      %v1545 = vrot.slane %v1400, 3
      %v1546 = vrot.slane %v1402, 3
      %v1547 = vrot.slane %v1442, 3
      %v1548 = vrot.slane %v1444, 3
      %1549 = vrot.lane.b32.xlu0 %v1545, 110
      %v1550 = vpop.permute.xlu0 %1549
      %1551 = vrot.lane.b32.xlu0 %v1546, 110
      %v1552 = vpop.permute.xlu0 %1551
      %1553 = vrot.lane.b32.xlu0 %v1547, 110
      %v1554 = vpop.permute.xlu0 %1553
      %1555 = vrot.lane.b32.xlu0 %v1548, 110
      %v1556 = vpop.permute.xlu0 %1555
      %v1557 = vsel %vm544, %v1550, %v1552
      %v1558 = vsel %vm544, %v1552, %v1554
      %v1559 = vsel %vm544, %v1554, %v1556
      %v1564 = vadd.f32 %v1541, %v1557
      %v1565 = vadd.f32 %v1542, %v1558
      %v1566 = vadd.f32 %v1543, %v1559
      %v1567 = vadd.f32 %v1544, %v1556
      %v1568 = vrot.slane %v1402, 4
      %v1569 = vrot.slane %v1442, 4
      %v1570 = vrot.slane %v1444, 4
      %1571 = vrot.lane.b32.xlu0 %v1568, 109
      %v1572 = vpop.permute.xlu0 %1571
      %1573 = vrot.lane.b32.xlu0 %v1569, 109
      %v1574 = vpop.permute.xlu0 %1573
      %1575 = vrot.lane.b32.xlu0 %v1570, 109
      %v1576 = vpop.permute.xlu0 %1575
      %v1577 = vsel %vm616, %v1572, %v1574
      %v1578 = vsel %vm616, %v1574, %v1576
      %v1583 = vadd.f32 %v1564, %v1572
      %v1584 = vadd.f32 %v1565, %v1577
      %v1585 = vadd.f32 %v1566, %v1578
      %v1586 = vadd.f32 %v1567, %v1576
      %v1588 = vrot.slane %v1402, 5
      %v1589 = vrot.slane %v1442, 5
      %v1590 = vrot.slane %v1444, 5
      %v1591 = vrot.slane %v1485, 5
      %1592 = vrot.lane.b32.xlu0 %v1588, 108
      %v1593 = vpop.permute.xlu0 %1592
      %1594 = vrot.lane.b32.xlu0 %v1589, 108
      %v1595 = vpop.permute.xlu0 %1594
      %1596 = vrot.lane.b32.xlu0 %v1590, 108
      %v1597 = vpop.permute.xlu0 %1596
      %1598 = vrot.lane.b32.xlu0 %v1591, 108
      %v1599 = vpop.permute.xlu0 %1598
      %v1600 = vsel %vm699, %v1593, %v1595
      %v1601 = vsel %vm699, %v1595, %v1597
      %v1602 = vsel %vm699, %v1597, %v1599
      %v1607 = vadd.f32 %v1583, %v1593
      %v1608 = vadd.f32 %v1584, %v1600
      %v1609 = vadd.f32 %v1585, %v1601
      %v1610 = vadd.f32 %v1586, %v1602
      %v1611 = vrot.slane %v1402, 6
      %v1612 = vrot.slane %v1442, 6
      %v1613 = vrot.slane %v1444, 6
      %v1614 = vrot.slane %v1485, 6
      %1615 = vrot.lane.b32.xlu0 %v1611, 92
      %v1616 = vpop.permute.xlu0 %1615
      %1617 = vrot.lane.b32.xlu0 %v1612, 92
      %v1618 = vpop.permute.xlu0 %1617
      %1619 = vrot.lane.b32.xlu0 %v1613, 92
      %v1620 = vpop.permute.xlu0 %1619
      %1621 = vrot.lane.b32.xlu0 %v1614, 92
      %v1622 = vpop.permute.xlu0 %1621
      %v1623 = vsel %vm762, %v1616, %v1618
      %v1624 = vsel %vm762, %v1618, %v1620
      %v1625 = vsel %vm762, %v1620, %v1622
      %v1630 = vadd.f32 %v1607, %v1616
      %v1631 = vadd.f32 %v1608, %v1623
      %v1632 = vadd.f32 %v1609, %v1624
      %v1633 = vadd.f32 %v1610, %v1625
      %v1634 = vrot.slane %v1402, 7
      %v1635 = vrot.slane %v1442, 7
      %v1636 = vrot.slane %v1444, 7
      %v1637 = vrot.slane %v1485, 7
      %1638 = vrot.lane.b32.xlu0 %v1634, 91
      %v1639 = vpop.permute.xlu0 %1638
      %1640 = vrot.lane.b32.xlu0 %v1635, 91
      %v1641 = vpop.permute.xlu0 %1640
      %1642 = vrot.lane.b32.xlu0 %v1636, 91
      %v1643 = vpop.permute.xlu0 %1642
      %1644 = vrot.lane.b32.xlu0 %v1637, 91
      %v1645 = vpop.permute.xlu0 %1644
      %v1646 = vsel %vm825, %v1639, %v1641
      %v1647 = vsel %vm825, %v1641, %v1643
      %v1648 = vsel %vm825, %v1643, %v1645
      %v1653 = vadd.f32 %v1630, %v1639
      %v1654 = vadd.f32 %v1631, %v1646
      %v1655 = vadd.f32 %v1632, %v1647
      %v1656 = vadd.f32 %v1633, %v1648
      %1661 = vrot.lane.b32.xlu0 %v1405, 90
      %v1662 = vpop.permute.xlu0 %1661
      %1663 = vrot.lane.b32.xlu0 %v1446, 90
      %v1664 = vpop.permute.xlu0 %1663
      %1665 = vrot.lane.b32.xlu0 %v1448, 90
      %v1666 = vpop.permute.xlu0 %1665
      %1667 = vrot.lane.b32.xlu0 %v1488, 90
      %v1668 = vpop.permute.xlu0 %1667
      %v1669 = vsel %vm888, %v1662, %v1664
      %v1670 = vsel %vm888, %v1664, %v1666
      %v1671 = vsel %vm888, %v1666, %v1668
      %v1676 = vadd.f32 %v1653, %v1662
      %v1677 = vadd.f32 %v1654, %v1669
      %v1678 = vadd.f32 %v1655, %v1670
      %v1679 = vadd.f32 %v1656, %v1671
      %1681 = vset.pattern.permute.xlu0 0
      %1682 = vperm.xlu0 %1681, %v327
      %v1683 = vpop.permute.xlu0 %1682
      %v1685 = vlaneseq
      %v1686 = vshrl.u32 %v1685, 7
      %v1687 = vsub.s32 0, %v1686
      %v1688 = vrot.slane %v1683, %v1687
      %v1689 = vadd.f32 %v1676, %v1688
      %v1690 = vadd.f32 %v1677, %v1688
      %v1691 = vadd.f32 %v1678, %v1688
      %v1692 = vadd.f32 %v1679, %v1688
      %v1697 = vcombine.low %v1689, %v1690
      %v1698 = vcombine.low %v1691, %v1692
      %v1700 = vunpack.c.l.s4 1966171168
      %v1701 = vunpack.c.0.s8 %v1700
      %v1702 = vlaneseq
      %v1703 = vshrl.u32 %v1702, 7
      %v1704 = vsub.s32 %v1701, %v1703
      %v1705 = vrot.slane %v1697, %v1704
      %v1707 = vunpack.c.l.s4 1966171168
      %v1708 = vunpack.c.0.s8 %v1707
      %v1709 = vlaneseq
      %v1710 = vshrl.u32 %v1709, 7
      %v1711 = vsub.s32 %v1708, %v1710
      %v1712 = vrot.slane %v1698, %v1711
      %v1713 = vcombine.low %v1705, %v1712
      %v1715 = vunpack.c.l.s4 1966171168
      %v1716 = vunpack.c.0.s8 %v1715
      %v1717 = vlaneseq
      %v1718 = vshrl.u32 %v1717, 7
      %v1719 = vsub.s32 %v1716, %v1718
      %v1720 = vrot.slane %v1713, %v1719
      %1721 = vrot.lane.b32.xlu0 %v1720, 19
      %v1722 = vpop.permute.xlu0 %1721
      %v1723 = vrot.slane %v1722, 1
      %vm1724 = vcmask 154624
      %v1725 = vsel %vm1724, %v1722, %v1723
      %v1727 = vlaneseq
      %vm1728 = vcmp.ge.s32.totalorder %v1727, 0
      %vm1729 = vcmp.lt.s32.totalorder %v1727, 384
      %vm1730 = vmand %vm1728, %vm1729
      %1731 = vst.msk [vmem:[%s302] sm:$0x7] %vm1730, %v1725
      %p1732 = scmp.lt.s32.totalorder %s21, 1
      %s1733 = scalar_select %p1732, %s21, 1
      %s1734 = smul.addr %s1733, 3
      %s1735 = scalar_lea.vmem %s8, %s1734
      // Predicated region
      $region53: #{forward.1} parent=51 // pred_check
        %p1736 = pneg %p212
      $region54: #{forward.1} parent=51 // pred_check_branch
        %1738 = sbr.rel (%p1736) target = $region56
      $region55: #{forward.1} parent=51 // pred_region
        _
      $region56: #{forward.1} parent=51 // pred_fallthru
        _
    $region52: #{forward.1} parent=5 // pred_fallthru
      _
    %p1739 = scmp.le.s32.totalorder 2, %s16
    // Predicated region
    $region57: #{forward.1} parent=5 // pred_check
      %p1740 = pneg %p1739
    $region58: #{forward.1} parent=5 // pred_check_branch
      %1742 = sbr.rel (%p1740) target = $region60
    $region59: #{forward.1} parent=5 // pred_region
      %s1743 = ssub.s32 %s16, 2
      // Predicated region
      $region61: #{forward.1} parent=59 // pred_check
        %p1744 = pneg %p218
      $region62: #{forward.1} parent=59 // pred_check_branch
        %1746 = sbr.rel (%p1744) target = $region64
      $region63: #{forward.1} parent=59 // pred_region
        %p1747 = scmp.lt.s32.totalorder %s22, 1
        %s1748 = scalar_select %p1747, %s22, 1
        %s1749 = smul.addr %s1748, 3
        %s1750 = scalar_lea.vmem %s8, %s1749
      $region64: #{forward.1} parent=59 // pred_fallthru
        _
    $region60: #{forward.1} parent=5 // pred_fallthru
      _
  $region6: #{forward.1} parent=0 // loop_footer
    %s20 = sadd.s32 1, %s16
  $region7: #{forward.1} parent=0 // loop_footer_branch
    %15 = sbr.rel target = $region3
  $region8: #{forward.1} parent=0 // loop_exit
    _

</llo_original>
